<compile_context>
chip_gen: v6e
topology: v6e:2x2x1
jax: 0.10.0
libtpu: 0.0.40
codegen_flags: <defaults>
</compile_context>

<pallas_src>
import math
import jax
import jax.numpy as jnp
from jax.experimental import pallas as pl
from jax.experimental.pallas import tpu as pltpu


def _mlp_dec_kernel(x_ref,
                    w1_ref, b1_ref,
                    w2_ref, b2_ref,
                    w3_ref, b3_ref,
                    w4_ref, b4_ref,
                    o_ref):
    cdt = jnp.bfloat16  # MXU operand dtype; accumulation stays f32.

    # fc1 + ReLU
    h = jnp.dot(x_ref[...].astype(cdt), w1_ref[...], preferred_element_type=jnp.float32)
    h = jnp.maximum(h + b1_ref[...], 0.0).astype(cdt)
    # fc2 + ReLU
    h = jnp.dot(h, w2_ref[...], preferred_element_type=jnp.float32)
    h = jnp.maximum(h + b2_ref[...], 0.0).astype(cdt)
    # fc3 + ReLU
    h = jnp.dot(h, w3_ref[...], preferred_element_type=jnp.float32)
    h = jnp.maximum(h + b3_ref[...], 0.0).astype(cdt)
    # fc4 + sigmoid (out_activation='sigmoid')
    h = jnp.dot(h, w4_ref[...], preferred_element_type=jnp.float32)
    o_ref[...] = jax.nn.sigmoid(h + b4_ref[...]).astype(o_ref.dtype)


def _round_up(v, m):
    return ((v + m - 1) // m) * m


def _pick_tile_m(n, cap=512):
    """Adaptive M tile: sublane-aligned (8), batch-sized for small N, capped at `cap`
    for large N, and split so the grid has >= 2 steps when possible (v7x: 2 TCs)."""
    granule = 8
    t = min(cap, _round_up(n, granule))
    if n > 2 * granule:
        t = min(t, _round_up(pl.cdiv(n, 2), granule))
    return max(t, granule)


def prepare_params(params):
    """One-time cast: weights -> bf16 (MXU operands), biases -> f32 (VPU math)."""
    return tuple((w.astype(jnp.bfloat16), b.astype(jnp.float32)) for (w, b) in params)


def mlp_dec_forward(x, params_k, out_dim, *, tile_m=None):
    """x: (N, in_dim) float32. params_k: output of prepare_params.
    Returns (N, 1, sqrt(out_dim), sqrt(out_dim)) float32."""
    (w1, b1), (w2, b2), (w3, b3), (w4, b4) = params_k
    N, in_dim = x.shape

    if tile_m is None:
        tile_m = _pick_tile_m(N)
    grid_m = pl.cdiv(N, tile_m)
    n_eff = grid_m * tile_m

    flops = 2 * n_eff * (in_dim * 256 + 256 * 512 + 512 * 1024 + 1024 * out_dim)
    bytes_accessed = (x.size * 4
                      + sum(w.size for (w, _) in params_k) * 2
                      + sum(b.size for (_, b) in params_k) * 4
                      + N * out_dim * 4)
    cost = pl.CostEstimate(flops=flops,
                           transcendentals=n_eff * out_dim,
                           bytes_accessed=bytes_accessed)

    def const_spec(shape):
        # Weights/biases: constant index_map -> fetched once, resident for the whole grid.
        return pl.BlockSpec(shape, lambda i, _n=len(shape): (0,) * _n)

    in_specs = [pl.BlockSpec((tile_m, in_dim), lambda i: (i, 0))]   # x tile
    for w, b in params_k:
        in_specs.append(const_spec(w.shape))
        in_specs.append(const_spec(b.shape))

    out_flat = pl.pallas_call(
        _mlp_dec_kernel,
        out_shape=jax.ShapeDtypeStruct((N, out_dim), jnp.float32),
        grid_spec=pltpu.PrefetchScalarGridSpec(
            num_scalar_prefetch=0,
            grid=(grid_m,),
            in_specs=in_specs,
            out_specs=pl.BlockSpec((tile_m, out_dim), lambda i: (i, 0)),
        ),
        compiler_params=pltpu.CompilerParams(
            dimension_semantics=("parallel",),
            vmem_limit_bytes=32 * 1024 * 1024),
        cost_estimate=cost,
    )(x, w1, b1, w2, b2, w3, b3, w4, b4)

    s = int(math.sqrt(out_dim))
    return out_flat.reshape(-1, 1, s, s)


def init_params(key, in_dim, out_dim):
    """Deterministic init mirroring nn.Linear shapes (stored transposed: (in, out))."""
    dims = [(in_dim, 256), (256, 512), (512, 1024), (1024, out_dim)]
    params = []
    for i, (fan_in, fan_out) in enumerate(dims):
        kw, kb, key = jax.random.split(jax.random.fold_in(key, i), 3)
        bound = 1.0 / math.sqrt(fan_in)
        w = jax.random.uniform(kw, (fan_in, fan_out), jnp.float32, -bound, bound)
        b = jax.random.uniform(kb, (1, fan_out), jnp.float32, -bound, bound)
        params.append((w, b))
    return params


def reference_forward_f32(x, params, out_dim):
    (w1, b1), (w2, b2), (w3, b3), (w4, b4) = params
    h = jnp.maximum(x @ w1 + b1, 0.0)
    h = jnp.maximum(h @ w2 + b2, 0.0)
    h = jnp.maximum(h @ w3 + b3, 0.0)
    h = jax.nn.sigmoid(h @ w4 + b4)
    s = int(math.sqrt(out_dim))
    return h.reshape(-1, 1, s, s)


def reference_forward_bf16(x, params, out_dim):
    """Mirrors the kernel numerics: bf16 dot operands, f32 accumulation/elementwise."""
    h = x.astype(jnp.bfloat16)
    for i, (w, b) in enumerate(params):
        h = jnp.dot(h.astype(jnp.bfloat16), w.astype(jnp.bfloat16),
                    preferred_element_type=jnp.float32) + b.astype(jnp.float32)
        h = jnp.maximum(h, 0.0) if i < 3 else jax.nn.sigmoid(h)
    s = int(math.sqrt(out_dim))
    return h.reshape(-1, 1, s, s)


if __name__ == "__main__":
    key = jax.random.PRNGKey(0)
    in_dim = 16          # latent dim fed to the decoder
    out_dim = 256        # 16x16 decoded image (sqrt(out_dim) = 16)
    N = 8                # small batch

    kx, kp = jax.random.split(key)
    x = jax.random.normal(kx, (N, in_dim), jnp.float32)
    params = init_params(kp, in_dim, out_dim)
    params_k = prepare_params(params)   # one-time bf16/f32 cast (no per-call converts)

    out = mlp_dec_forward(x, params_k, out_dim)
    out = jax.block_until_ready(out)
    assert out.shape == (N, 1, 16, 16), out.shape

    # Tight check vs. a reference using the same bf16-operand / f32-accum numerics.
    ref_bf16 = reference_forward_bf16(x, params, out_dim)
    assert jnp.allclose(out, ref_bf16, atol=1e-3, rtol=1e-3), "mismatch vs bf16 reference"
    # Loose check vs. the full-f32 PyTorch-equivalent reference (bf16 operand rounding).
    ref_f32 = reference_forward_f32(x, params, out_dim)
    assert jnp.allclose(out, ref_f32, atol=5e-2, rtol=5e-2), "mismatch vs f32 reference"

    # Second run exercising the ragged (masked) last block and a >=2-step grid.
    N2 = 40
    x2 = jax.random.normal(jax.random.fold_in(key, 7), (N2, in_dim), jnp.float32)
    out2 = jax.block_until_ready(mlp_dec_forward(x2, params_k, out_dim))
    assert out2.shape == (N2, 1, 16, 16), out2.shape
    ref2 = reference_forward_bf16(x2, params, out_dim)
    assert jnp.allclose(out2, ref2, atol=1e-3, rtol=1e-3), "mismatch on ragged-grid case"

    print("KERNEL_OK")
</pallas_src>

<mosaic_0001>
module attributes {stable_mosaic.version = 11 : i64} {
  func.func @_mlp_dec_kernel(%arg0: i32, %arg1: memref<8x16xf32, #tpu.memory_space<vmem>>, %arg2: memref<16x256xbf16, #tpu.memory_space<vmem>>, %arg3: memref<1x256xf32, #tpu.memory_space<vmem>>, %arg4: memref<256x512xbf16, #tpu.memory_space<vmem>>, %arg5: memref<1x512xf32, #tpu.memory_space<vmem>>, %arg6: memref<512x1024xbf16, #tpu.memory_space<vmem>>, %arg7: memref<1x1024xf32, #tpu.memory_space<vmem>>, %arg8: memref<1024x256xbf16, #tpu.memory_space<vmem>>, %arg9: memref<1x256xf32, #tpu.memory_space<vmem>>, %arg10: memref<8x256xf32, #tpu.memory_space<vmem>>) attributes {dimension_semantics = [#tpu.dimension_semantics<parallel>], iteration_bounds = array<i64: 1>, scalar_prefetch = 0 : i64, scratch_operands = 0 : i64, tpu.core_type = #tpu.core_type<tc>, window_params = [{transform_indices = @transform_0, window_bounds = array<i64: 8, 16>}, {pipeline_mode = #tpu.pipeline_mode<synchronous>, transform_indices = @transform_1, window_bounds = array<i64: 16, 256>}, {pipeline_mode = #tpu.pipeline_mode<synchronous>, transform_indices = @transform_2, window_bounds = array<i64: 1, 256>}, {pipeline_mode = #tpu.pipeline_mode<synchronous>, transform_indices = @transform_3, window_bounds = array<i64: 256, 512>}, {pipeline_mode = #tpu.pipeline_mode<synchronous>, transform_indices = @transform_4, window_bounds = array<i64: 1, 512>}, {pipeline_mode = #tpu.pipeline_mode<synchronous>, transform_indices = @transform_5, window_bounds = array<i64: 512, 1024>}, {pipeline_mode = #tpu.pipeline_mode<synchronous>, transform_indices = @transform_6, window_bounds = array<i64: 1, 1024>}, {pipeline_mode = #tpu.pipeline_mode<synchronous>, transform_indices = @transform_7, window_bounds = array<i64: 1024, 256>}, {pipeline_mode = #tpu.pipeline_mode<synchronous>, transform_indices = @transform_8, window_bounds = array<i64: 1, 256>}, {transform_indices = @transform_9, window_bounds = array<i64: 8, 256>}]} {
    %c0 = arith.constant 0 : index
    %c0_0 = arith.constant 0 : index
    %0 = vector.load %arg1[%c0, %c0_0] : memref<8x16xf32, #tpu.memory_space<vmem>>, vector<8x16xf32>
    %1 = arith.truncf %0 : vector<8x16xf32> to vector<8x16xbf16>
    %c0_1 = arith.constant 0 : index
    %c0_2 = arith.constant 0 : index
    %2 = vector.load %arg2[%c0_1, %c0_2] : memref<16x256xbf16, #tpu.memory_space<vmem>>, vector<16x256xbf16>
    %cst = arith.constant dense<0.000000e+00> : vector<8x256xf32>
    %3 = tpu.matmul %1, %2, %cst {dimension_numbers = #tpu.dot_dimension_numbers<[1], [0], [0], [1], [0, 0, 1, 1], [], []>} : vector<8x16xbf16>, vector<16x256xbf16>, vector<8x256xf32> -> vector<8x256xf32>
    %c0_3 = arith.constant 0 : index
    %c0_4 = arith.constant 0 : index
    %4 = vector.load %arg3[%c0_3, %c0_4] : memref<1x256xf32, #tpu.memory_space<vmem>>, vector<1x256xf32>
    %5 = vector.broadcast %4 : vector<1x256xf32> to vector<8x256xf32>
    %6 = arith.addf %3, %5 : vector<8x256xf32>
    %cst_5 = arith.constant 0.000000e+00 : f32
    %7 = vector.broadcast %cst_5 : f32 to vector<8x256xf32>
    %8 = arith.maximumf %6, %7 : vector<8x256xf32>
    %9 = arith.truncf %8 : vector<8x256xf32> to vector<8x256xbf16>
    %c0_6 = arith.constant 0 : index
    %c0_7 = arith.constant 0 : index
    %10 = vector.load %arg4[%c0_6, %c0_7] : memref<256x512xbf16, #tpu.memory_space<vmem>>, vector<256x512xbf16>
    %cst_8 = arith.constant dense<0.000000e+00> : vector<8x512xf32>
    %11 = tpu.matmul %9, %10, %cst_8 {dimension_numbers = #tpu.dot_dimension_numbers<[1], [0], [0], [1], [0, 0, 1, 1], [], []>} : vector<8x256xbf16>, vector<256x512xbf16>, vector<8x512xf32> -> vector<8x512xf32>
    %c0_9 = arith.constant 0 : index
    %c0_10 = arith.constant 0 : index
    %12 = vector.load %arg5[%c0_9, %c0_10] : memref<1x512xf32, #tpu.memory_space<vmem>>, vector<1x512xf32>
    %13 = vector.broadcast %12 : vector<1x512xf32> to vector<8x512xf32>
    %14 = arith.addf %11, %13 : vector<8x512xf32>
    %cst_11 = arith.constant 0.000000e+00 : f32
    %15 = vector.broadcast %cst_11 : f32 to vector<8x512xf32>
    %16 = arith.maximumf %14, %15 : vector<8x512xf32>
    %17 = arith.truncf %16 : vector<8x512xf32> to vector<8x512xbf16>
    %c0_12 = arith.constant 0 : index
    %c0_13 = arith.constant 0 : index
    %18 = vector.load %arg6[%c0_12, %c0_13] : memref<512x1024xbf16, #tpu.memory_space<vmem>>, vector<512x1024xbf16>
    %cst_14 = arith.constant dense<0.000000e+00> : vector<8x1024xf32>
    %19 = tpu.matmul %17, %18, %cst_14 {dimension_numbers = #tpu.dot_dimension_numbers<[1], [0], [0], [1], [0, 0, 1, 1], [], []>} : vector<8x512xbf16>, vector<512x1024xbf16>, vector<8x1024xf32> -> vector<8x1024xf32>
    %c0_15 = arith.constant 0 : index
    %c0_16 = arith.constant 0 : index
    %20 = vector.load %arg7[%c0_15, %c0_16] : memref<1x1024xf32, #tpu.memory_space<vmem>>, vector<1x1024xf32>
    %21 = vector.broadcast %20 : vector<1x1024xf32> to vector<8x1024xf32>
    %22 = arith.addf %19, %21 : vector<8x1024xf32>
    %cst_17 = arith.constant 0.000000e+00 : f32
    %23 = vector.broadcast %cst_17 : f32 to vector<8x1024xf32>
    %24 = arith.maximumf %22, %23 : vector<8x1024xf32>
    %25 = arith.truncf %24 : vector<8x1024xf32> to vector<8x1024xbf16>
    %c0_18 = arith.constant 0 : index
    %c0_19 = arith.constant 0 : index
    %26 = vector.load %arg8[%c0_18, %c0_19] : memref<1024x256xbf16, #tpu.memory_space<vmem>>, vector<1024x256xbf16>
    %cst_20 = arith.constant dense<0.000000e+00> : vector<8x256xf32>
    %27 = tpu.matmul %25, %26, %cst_20 {dimension_numbers = #tpu.dot_dimension_numbers<[1], [0], [0], [1], [0, 0, 1, 1], [], []>} : vector<8x1024xbf16>, vector<1024x256xbf16>, vector<8x256xf32> -> vector<8x256xf32>
    %c0_21 = arith.constant 0 : index
    %c0_22 = arith.constant 0 : index
    %28 = vector.load %arg9[%c0_21, %c0_22] : memref<1x256xf32, #tpu.memory_space<vmem>>, vector<1x256xf32>
    %29 = vector.broadcast %28 : vector<1x256xf32> to vector<8x256xf32>
    %30 = arith.addf %27, %29 : vector<8x256xf32>
    %31 = arith.negf %30 : vector<8x256xf32>
    %32 = math.exp %31 : vector<8x256xf32>
    %cst_23 = arith.constant 1.000000e+00 : f32
    %33 = vector.broadcast %cst_23 : f32 to vector<8x256xf32>
    %34 = arith.addf %33, %32 : vector<8x256xf32>
    %35 = arith.divf %33, %34 : vector<8x256xf32>
    %c0_24 = arith.constant 0 : index
    %c0_25 = arith.constant 0 : index
    %36 = vector.load %arg10[%c0_24, %c0_25] : memref<8x256xf32, #tpu.memory_space<vmem>>, vector<8x256xf32>
    tpu.vector_store %arg10[%c0_24, %c0_25], %35 {strides = array<i32>} : memref<8x256xf32, #tpu.memory_space<vmem>>, vector<8x256xf32>,
    return
  }
  func.func @transform_0(%arg0: i32) -> (i32, i32) {
    %c0_i32 = arith.constant 0 : i32
    %c0_i32_0 = arith.constant 0 : i32
    return %arg0, %c0_i32 : i32, i32
  }
  func.func @transform_1(%arg0: i32) -> (i32, i32) {
    %c0_i32 = arith.constant 0 : i32
    %c0_i32_0 = arith.constant 0 : i32
    %c0_i32_1 = arith.constant 0 : i32
    return %c0_i32, %c0_i32_0 : i32, i32
  }
  func.func @transform_2(%arg0: i32) -> (i32, i32) {
    %c0_i32 = arith.constant 0 : i32
    %c0_i32_0 = arith.constant 0 : i32
    %c0_i32_1 = arith.constant 0 : i32
    return %c0_i32, %c0_i32_0 : i32, i32
  }
  func.func @transform_3(%arg0: i32) -> (i32, i32) {
    %c0_i32 = arith.constant 0 : i32
    %c0_i32_0 = arith.constant 0 : i32
    %c0_i32_1 = arith.constant 0 : i32
    return %c0_i32, %c0_i32_0 : i32, i32
  }
  func.func @transform_4(%arg0: i32) -> (i32, i32) {
    %c0_i32 = arith.constant 0 : i32
    %c0_i32_0 = arith.constant 0 : i32
    %c0_i32_1 = arith.constant 0 : i32
    return %c0_i32, %c0_i32_0 : i32, i32
  }
  func.func @transform_5(%arg0: i32) -> (i32, i32) {
    %c0_i32 = arith.constant 0 : i32
    %c0_i32_0 = arith.constant 0 : i32
    %c0_i32_1 = arith.constant 0 : i32
    return %c0_i32, %c0_i32_0 : i32, i32
  }
  func.func @transform_6(%arg0: i32) -> (i32, i32) {
    %c0_i32 = arith.constant 0 : i32
    %c0_i32_0 = arith.constant 0 : i32
    %c0_i32_1 = arith.constant 0 : i32
    return %c0_i32, %c0_i32_0 : i32, i32
  }
  func.func @transform_7(%arg0: i32) -> (i32, i32) {
    %c0_i32 = arith.constant 0 : i32
    %c0_i32_0 = arith.constant 0 : i32
    %c0_i32_1 = arith.constant 0 : i32
    return %c0_i32, %c0_i32_0 : i32, i32
  }
  func.func @transform_8(%arg0: i32) -> (i32, i32) {
    %c0_i32 = arith.constant 0 : i32
    %c0_i32_0 = arith.constant 0 : i32
    %c0_i32_1 = arith.constant 0 : i32
    return %c0_i32, %c0_i32_0 : i32, i32
  }
  func.func @transform_9(%arg0: i32) -> (i32, i32) {
    %c0_i32 = arith.constant 0 : i32
    %c0_i32_0 = arith.constant 0 : i32
    return %arg0, %c0_i32 : i32, i32
  }
}

</mosaic_0001>

<llo_original>
// kernel: tpu_custom_call.1
$region0: #{tpu_custom_call.1}
  #allocation0 [shape = 'u32[]', space=smem, size = 0x4, offset = 0x4, fixed_abs, tag = 'smem constant byte address 0x4 - core index']
  #allocation1 [shape = 'u32[144,128]{1,0:T(1,128)}', space=vmem, size = 0x12000, scoped, tag = 'internal scratch']
  %s0 = inlined_call_operand.hbm [shape: f32[8,16], index: 0, kind: input, shape index: {}]
  %s1 = inlined_call_operand.hbm [shape: bf16[16,256], index: 1, kind: input, shape index: {}]
  %s2 = inlined_call_operand.vmem [shape: f32[1,256], index: 2, kind: input, shape index: {}]
  %s3 = inlined_call_operand.hbm [shape: bf16[256,512], index: 3, kind: input, shape index: {}]
  %s4 = inlined_call_operand.hbm [shape: f32[1,512], index: 4, kind: input, shape index: {}]
  %s5 = inlined_call_operand.hbm [shape: bf16[512,1024], index: 5, kind: input, shape index: {}]
  %s6 = inlined_call_operand.vmem [shape: f32[1,1024], index: 6, kind: input, shape index: {}]
  %s7 = inlined_call_operand.hbm [shape: bf16[1024,256], index: 7, kind: input, shape index: {}]
  %s8 = inlined_call_operand.vmem [shape: f32[1,256], index: 8, kind: input, shape index: {}]
  %s9 = inlined_call_operand.hbm [shape: f32[8,256], index: 9, kind: output, shape index: {}]
  %s10 = sld [smem:[#allocation0]]
  $region70: #{tpu_custom_call.1} parent=0
    _
  %s12 = ssub.s32 1, %s10
  %s13 = scalar_select 0, %s12, %s10
  $region1: #{tpu_custom_call.1} parent=0
    #allocation2 [shape = 'u8[4096]{0}', space=vmem, size = 0x1000, scoped, tag = 'input window, operand 0, single buffered']
    #allocation3 [shape = 's32[1]{0}', space=sflag, size = 0x4, scoped, tag = 'scoped memory for tpu_custom_call.1']
    #allocation4 [shape = 's32[1]{0}', space=sflag, size = 0x4, scoped, tag = 'scoped memory for tpu_custom_call.1']
    #allocation5 [shape = 'u8[8192]{0}', space=vmem, size = 0x2000, scoped, tag = 'input window, operand 1, single buffered']
    #allocation6 [shape = 's32[1]{0}', space=sflag, size = 0x4, scoped, tag = 'scoped memory for tpu_custom_call.1']
    #allocation7 [shape = 'u8[262144]{0}', space=vmem, size = 0x40000, scoped, tag = 'input window, operand 3, single buffered']
    #allocation8 [shape = 'u8[2048]{0}', space=vmem, size = 0x800, scoped, tag = 'input window, operand 4, single buffered']
    #allocation9 [shape = 's32[1]{0}', space=sflag, size = 0x4, scoped, tag = 'scoped memory for tpu_custom_call.1']
    #allocation10 [shape = 'u8[1048576]{0}', space=vmem, size = 0x100000, scoped, tag = 'input window, operand 5, single buffered']
    #allocation11 [shape = 'u8[524288]{0}', space=vmem, size = 0x80000, scoped, tag = 'input window, operand 7, single buffered']
    #allocation12 [shape = 's32[1]{0}', space=sflag, size = 0x4, scoped, tag = 'scoped memory for tpu_custom_call.1']
    #allocation13 [shape = 'u8[8192]{0}', space=vmem, size = 0x2000, scoped, tag = 'output window, operand 0, single buffered']
    %14 = vsyncpa [#allocation3], 0
    %15 = vsyncpa [#allocation6], 0
    %16 = vsyncpa [#allocation9], 0
    %17 = vsyncpa [#allocation12], 0
    %18 = vsyncpa [#allocation4], 0
    // Predicated region
    $region2: #{tpu_custom_call.1} parent=1 // pred_check
      _
    $region3: #{tpu_custom_call.1} parent=1 // pred_check_branch
      %20 = sbr.rel (0) target = $region5
    $region4: #{tpu_custom_call.1} parent=1 // pred_region
      %s22 = ssub.s32 128, 128
      %23 = vsyncadd [#allocation3], %s22
      %s25 = sshll.u32 [#allocation2], 4
      %s26 = int_to_ptr.vmem [resolvable:$true] %s25
      %28 = dma.hbm_to_vmem [thread:$0]  %s0, 128, %s26, [#allocation3]
    $region5: #{tpu_custom_call.1} parent=1 // pred_fallthru
      _
    // Predicated region
    $region6: #{tpu_custom_call.1} parent=1 // pred_check
      _
    $region7: #{tpu_custom_call.1} parent=1 // pred_check_branch
      %30 = sbr.rel (0) target = $region9
    $region8: #{tpu_custom_call.1} parent=1 // pred_region
      %s32 = ssub.s32 256, 256
      %33 = vsyncadd [#allocation6], %s32
      %s34 = sshll.u32 [#allocation5], 4
      %s35 = int_to_ptr.vmem [resolvable:$true] %s34
      %40 = dma.hbm_to_vmem [thread:$0]  %s1, 256, %s35, [#allocation6], 128, 128, 8
    $region9: #{tpu_custom_call.1} parent=1 // pred_fallthru
      _
    // Predicated region
    $region10: #{tpu_custom_call.1} parent=1 // pred_check
      _
    $region11: #{tpu_custom_call.1} parent=1 // pred_check_branch
      %42 = sbr.rel (0) target = $region13
    $region12: #{tpu_custom_call.1} parent=1 // pred_region
      _
    $region13: #{tpu_custom_call.1} parent=1 // pred_fallthru
      _
    // Predicated region
    $region14: #{tpu_custom_call.1} parent=1 // pred_check
      _
    $region15: #{tpu_custom_call.1} parent=1 // pred_check_branch
      %44 = sbr.rel (0) target = $region17
    $region16: #{tpu_custom_call.1} parent=1 // pred_region
      %s46 = ssub.s32 8192, 8192
      %47 = vsyncadd [#allocation6], %s46
      %s48 = sshll.u32 [#allocation7], 4
      %s49 = int_to_ptr.vmem [resolvable:$true] %s48
      %54 = dma.hbm_to_vmem [thread:$0]  %s3, 8192, %s49, [#allocation6], 256, 256, 16
    $region17: #{tpu_custom_call.1} parent=1 // pred_fallthru
      _
    // Predicated region
    $region18: #{tpu_custom_call.1} parent=1 // pred_check
      _
    $region19: #{tpu_custom_call.1} parent=1 // pred_check_branch
      %56 = sbr.rel (0) target = $region21
    $region20: #{tpu_custom_call.1} parent=1 // pred_region
      %s58 = ssub.s32 64, 64
      %59 = vsyncadd [#allocation9], %s58
      %s61 = sshll.u32 [#allocation8], 4
      %s62 = int_to_ptr.vmem [resolvable:$true] %s61
      %64 = dma.hbm_to_vmem [thread:$0]  %s4, 64, %s62, [#allocation9]
    $region21: #{tpu_custom_call.1} parent=1 // pred_fallthru
      _
    // Predicated region
    $region22: #{tpu_custom_call.1} parent=1 // pred_check
      _
    $region23: #{tpu_custom_call.1} parent=1 // pred_check_branch
      %66 = sbr.rel (0) target = $region25
    $region24: #{tpu_custom_call.1} parent=1 // pred_region
      %s68 = ssub.s32 32768, 32768
      %69 = vsyncadd [#allocation9], %s68
      %s70 = sshll.u32 [#allocation10], 4
      %s71 = int_to_ptr.vmem [resolvable:$true] %s70
      %76 = dma.hbm_to_vmem [thread:$0]  %s5, 32768, %s71, [#allocation9], 512, 512, 32
    $region25: #{tpu_custom_call.1} parent=1 // pred_fallthru
      _
    // Predicated region
    $region26: #{tpu_custom_call.1} parent=1 // pred_check
      _
    $region27: #{tpu_custom_call.1} parent=1 // pred_check_branch
      %78 = sbr.rel (0) target = $region29
    $region28: #{tpu_custom_call.1} parent=1 // pred_region
      _
    $region29: #{tpu_custom_call.1} parent=1 // pred_fallthru
      _
    // Predicated region
    $region30: #{tpu_custom_call.1} parent=1 // pred_check
      _
    $region31: #{tpu_custom_call.1} parent=1 // pred_check_branch
      %80 = sbr.rel (0) target = $region33
    $region32: #{tpu_custom_call.1} parent=1 // pred_region
      %s82 = ssub.s32 16384, 16384
      %83 = vsyncadd [#allocation12], %s82
      %s84 = sshll.u32 [#allocation11], 4
      %s85 = int_to_ptr.vmem [resolvable:$true] %s84
      %90 = dma.hbm_to_vmem [thread:$0]  %s7, 16384, %s85, [#allocation12], 128, 128, 8
    $region33: #{tpu_custom_call.1} parent=1 // pred_fallthru
      _
    // Predicated region
    $region34: #{tpu_custom_call.1} parent=1 // pred_check
      _
    $region35: #{tpu_custom_call.1} parent=1 // pred_check_branch
      %92 = sbr.rel (0) target = $region37
    $region36: #{tpu_custom_call.1} parent=1 // pred_region
      _
    $region37: #{tpu_custom_call.1} parent=1 // pred_fallthru
      _
    // Predicated region
    $region38: #{tpu_custom_call.1} parent=1 // pred_check
      _
    $region39: #{tpu_custom_call.1} parent=1 // pred_check_branch
      %94 = sbr.rel (0) target = $region41
    $region40: #{tpu_custom_call.1} parent=1 // pred_region
      %95 = dma.done [#allocation3], 128
    $region41: #{tpu_custom_call.1} parent=1 // pred_fallthru
      _
    // Predicated region
    $region42: #{tpu_custom_call.1} parent=1 // pred_check
      _
    $region43: #{tpu_custom_call.1} parent=1 // pred_check_branch
      %97 = sbr.rel (0) target = $region45
    $region44: #{tpu_custom_call.1} parent=1 // pred_region
      %98 = dma.done [#allocation6], 256
    $region45: #{tpu_custom_call.1} parent=1 // pred_fallthru
      _
    // Predicated region
    $region46: #{tpu_custom_call.1} parent=1 // pred_check
      _
    $region47: #{tpu_custom_call.1} parent=1 // pred_check_branch
      %100 = sbr.rel (0) target = $region49
    $region48: #{tpu_custom_call.1} parent=1 // pred_region
      %101 = dma.done [#allocation6], 8192
    $region49: #{tpu_custom_call.1} parent=1 // pred_fallthru
      _
    // Predicated region
    $region50: #{tpu_custom_call.1} parent=1 // pred_check
      _
    $region51: #{tpu_custom_call.1} parent=1 // pred_check_branch
      %103 = sbr.rel (0) target = $region53
    $region52: #{tpu_custom_call.1} parent=1 // pred_region
      %104 = dma.done [#allocation9], 64
    $region53: #{tpu_custom_call.1} parent=1 // pred_fallthru
      _
    // Predicated region
    $region54: #{tpu_custom_call.1} parent=1 // pred_check
      _
    $region55: #{tpu_custom_call.1} parent=1 // pred_check_branch
      %106 = sbr.rel (0) target = $region57
    $region56: #{tpu_custom_call.1} parent=1 // pred_region
      %107 = dma.done [#allocation9], 32768
    $region57: #{tpu_custom_call.1} parent=1 // pred_fallthru
      _
    // Predicated region
    $region58: #{tpu_custom_call.1} parent=1 // pred_check
      _
    $region59: #{tpu_custom_call.1} parent=1 // pred_check_branch
      %109 = sbr.rel (0) target = $region61
    $region60: #{tpu_custom_call.1} parent=1 // pred_region
      %110 = dma.done [#allocation12], 16384
    $region61: #{tpu_custom_call.1} parent=1 // pred_fallthru
      _
    %v112 = vld [vmem:[#allocation2] sm:$0xff]
    %v113 = vpack.c.bf16 %v112, %v112
    %v114 = vld [vmem:[#allocation5] sm:$0xff]
    %v115 = vld [vmem:[#allocation5 + $0x8] sm:$0xff]
    %v116 = vld [vmem:[%s2] sm:$0x3]
    %v118 = vlaneseq
    %v119 = vshrl.u32 %v118, 7
    %v120 = vsub.s32 0, %v119
    %v121 = vrot.slane %v116, %v120
    %v122 = vlaneseq
    %v123 = vshrl.u32 %v122, 7
    %v124 = vsub.s32 1, %v123
    %v125 = vrot.slane %v116, %v124
    %v130 = vunpack.c.l.b16 %v114
    %v131 = vunpack.c.h.b16 %v114
    %v132 = vunpack.c.l.b16 %v115
    %v133 = vunpack.c.h.b16 %v115
    %v134 = vpack.c.b16 %v132, %v130
    %v135 = vpack.c.b16 %v133, %v131
    %vm138 = vcmask 130048
    %v140 = vsel %vm138, %v113, 0
    %142 = vmatprep.subr.bf16.mxu0 0
    %143 = vmatpush1.bf16.msra.mxu0 0
    %144 = vmatprep.subr.bf16.mxu0 0
    %145 = vmatpush1.bf16.msra.mxu0 0
    %146 = vmatprep.subr.bf16.mxu0 0
    %147 = vmatpush1.bf16.msra.mxu0 0
    %148 = vmatprep.subr.bf16.mxu0 0
    %149 = vmatpush1.bf16.msra.mxu0 0
    %150 = vmatprep.subr.bf16.mxu0 0
    %151 = vmatpush1.bf16.msra.mxu0 0
    %152 = vmatprep.subr.bf16.mxu0 0
    %153 = vmatpush1.bf16.msra.mxu0 0
    %154 = vmatprep.subr.bf16.mxu0 0
    %155 = vmatpush1.bf16.msra.mxu0 0
    %156 = vmatprep.subr.bf16.mxu0 %v135
    %157 = vmatpush1.bf16.msra.mxu0 %v134
    %158 = vmatprep.subr.bf16.mxu0 0
    %159 = vmatpush2.bf16.msra.mxu0 0
    %160 = vmatprep.subr.bf16.mxu0 0
    %161 = vmatpush2.bf16.msra.mxu0 0
    %162 = vmatprep.subr.bf16.mxu0 0
    %163 = vmatpush2.bf16.msra.mxu0 0
    %164 = vmatprep.subr.bf16.mxu0 0
    %165 = vmatpush2.bf16.msra.mxu0 0
    %166 = vmatprep.subr.bf16.mxu0 0
    %167 = vmatpush2.bf16.msra.mxu0 0
    %168 = vmatprep.subr.bf16.mxu0 0
    %169 = vmatpush2.bf16.msra.mxu0 0
    %170 = vmatprep.subr.bf16.mxu0 0
    %171 = vmatpush2.bf16.msra.mxu0 0
    %172 = vmatprep.subr.bf16.mxu0 0
    %173 = vmatpush2.bf16.msra.mxu0 0
    %174 = vmatprep.mubr.bf16.mxu0 0
    %175 = vmatmul.mubr.bf16.gmra.mxu0 %v140
    %v176 = vpop.f32.mrf.mxu0
    %v177 = vadd.f32 %v121, %v176
    %v178 = vpop.f32.mrf.mxu0
    %v179 = vadd.f32 %v125, %v178
    %v180 = vpop.f32.mrf.mxu0
    %v181 = vpop.f32.mrf.mxu0
    %182 = vdwg.mxu0
    %v183 = vmax.f32 %v177, 0.0
    %v184 = vmax.f32 %v179, 0.0
    %v185 = vpack.c.bf16 %v183, %v183
    %v186 = vpack.c.bf16 %v184, %v184
    %v187 = vld [vmem:[#allocation7] sm:$0xff]
    %v188 = vld [vmem:[#allocation7 + $0x8] sm:$0xff]
    %v189 = vld [vmem:[#allocation7 + $0x10] sm:$0xff]
    %v190 = vld [vmem:[#allocation7 + $0x18] sm:$0xff]
    %v191 = vld [vmem:[#allocation7 + $0x20] sm:$0xff]
    %v192 = vld [vmem:[#allocation7 + $0x28] sm:$0xff]
    %v193 = vld [vmem:[#allocation7 + $0x30] sm:$0xff]
    %v194 = vld [vmem:[#allocation7 + $0x38] sm:$0xff]
    %v195 = vld [vmem:[#allocation7 + $0x40] sm:$0xff]
    %v196 = vld [vmem:[#allocation7 + $0x48] sm:$0xff]
    %v197 = vld [vmem:[#allocation7 + $0x50] sm:$0xff]
    %v198 = vld [vmem:[#allocation7 + $0x58] sm:$0xff]
    %v199 = vld [vmem:[#allocation7 + $0x60] sm:$0xff]
    %v200 = vld [vmem:[#allocation7 + $0x68] sm:$0xff]
    %v201 = vld [vmem:[#allocation7 + $0x70] sm:$0xff]
    %v202 = vld [vmem:[#allocation7 + $0x78] sm:$0xff]
    %v203 = vld [vmem:[#allocation7 + $0x80] sm:$0xff]
    %v204 = vld [vmem:[#allocation7 + $0x88] sm:$0xff]
    %v205 = vld [vmem:[#allocation7 + $0x90] sm:$0xff]
    %v206 = vld [vmem:[#allocation7 + $0x98] sm:$0xff]
    %v207 = vld [vmem:[#allocation7 + $0xa0] sm:$0xff]
    %v208 = vld [vmem:[#allocation7 + $0xa8] sm:$0xff]
    %v209 = vld [vmem:[#allocation7 + $0xb0] sm:$0xff]
    %v210 = vld [vmem:[#allocation7 + $0xb8] sm:$0xff]
    %v211 = vld [vmem:[#allocation7 + $0xc0] sm:$0xff]
    %v212 = vld [vmem:[#allocation7 + $0xc8] sm:$0xff]
    %v213 = vld [vmem:[#allocation7 + $0xd0] sm:$0xff]
    %v214 = vld [vmem:[#allocation7 + $0xd8] sm:$0xff]
    %v215 = vld [vmem:[#allocation7 + $0xe0] sm:$0xff]
    %v216 = vld [vmem:[#allocation7 + $0xe8] sm:$0xff]
    %v217 = vld [vmem:[#allocation7 + $0xf0] sm:$0xff]
    %v218 = vld [vmem:[#allocation7 + $0xf8] sm:$0xff]
    %v219 = vld [vmem:[#allocation7 + $0x100] sm:$0xff]
    %v220 = vld [vmem:[#allocation7 + $0x108] sm:$0xff]
    %v221 = vld [vmem:[#allocation7 + $0x110] sm:$0xff]
    %v222 = vld [vmem:[#allocation7 + $0x118] sm:$0xff]
    %v223 = vld [vmem:[#allocation7 + $0x120] sm:$0xff]
    %v224 = vld [vmem:[#allocation7 + $0x128] sm:$0xff]
    %v225 = vld [vmem:[#allocation7 + $0x130] sm:$0xff]
    %v226 = vld [vmem:[#allocation7 + $0x138] sm:$0xff]
    %v227 = vld [vmem:[#allocation7 + $0x140] sm:$0xff]
    %v228 = vld [vmem:[#allocation7 + $0x148] sm:$0xff]
    %v229 = vld [vmem:[#allocation7 + $0x150] sm:$0xff]
    %v230 = vld [vmem:[#allocation7 + $0x158] sm:$0xff]
    %v231 = vld [vmem:[#allocation7 + $0x160] sm:$0xff]
    %v232 = vld [vmem:[#allocation7 + $0x168] sm:$0xff]
    %v233 = vld [vmem:[#allocation7 + $0x170] sm:$0xff]
    %v234 = vld [vmem:[#allocation7 + $0x178] sm:$0xff]
    %v235 = vld [vmem:[#allocation7 + $0x180] sm:$0xff]
    %v236 = vld [vmem:[#allocation7 + $0x188] sm:$0xff]
    %v237 = vld [vmem:[#allocation7 + $0x190] sm:$0xff]
    %v238 = vld [vmem:[#allocation7 + $0x198] sm:$0xff]
    %v239 = vld [vmem:[#allocation7 + $0x1a0] sm:$0xff]
    %v240 = vld [vmem:[#allocation7 + $0x1a8] sm:$0xff]
    %v241 = vld [vmem:[#allocation7 + $0x1b0] sm:$0xff]
    %v242 = vld [vmem:[#allocation7 + $0x1b8] sm:$0xff]
    %v243 = vld [vmem:[#allocation7 + $0x1c0] sm:$0xff]
    %v244 = vld [vmem:[#allocation7 + $0x1c8] sm:$0xff]
    %v245 = vld [vmem:[#allocation7 + $0x1d0] sm:$0xff]
    %v246 = vld [vmem:[#allocation7 + $0x1d8] sm:$0xff]
    %v247 = vld [vmem:[#allocation7 + $0x1e0] sm:$0xff]
    %v248 = vld [vmem:[#allocation7 + $0x1e8] sm:$0xff]
    %v249 = vld [vmem:[#allocation7 + $0x1f0] sm:$0xff]
    %v250 = vld [vmem:[#allocation7 + $0x1f8] sm:$0xff]
    %v251 = vld [vmem:[#allocation8] sm:$0xf]
    %v253 = vlaneseq
    %v254 = vshrl.u32 %v253, 7
    %v255 = vsub.s32 0, %v254
    %v256 = vrot.slane %v251, %v255
    %v257 = vlaneseq
    %v258 = vshrl.u32 %v257, 7
    %v259 = vsub.s32 1, %v258
    %v260 = vrot.slane %v251, %v259
    %v261 = vlaneseq
    %v262 = vshrl.u32 %v261, 7
    %v263 = vsub.s32 2, %v262
    %v264 = vrot.slane %v251, %v263
    %v265 = vlaneseq
    %v266 = vshrl.u32 %v265, 7
    %v267 = vsub.s32 3, %v266
    %v268 = vrot.slane %v251, %v267
    %v337 = vunpack.c.l.b16 %v187
    %v338 = vunpack.c.h.b16 %v187
    %v339 = vunpack.c.l.b16 %v188
    %v340 = vunpack.c.h.b16 %v188
    %v341 = vunpack.c.l.b16 %v189
    %v342 = vunpack.c.h.b16 %v189
    %v343 = vunpack.c.l.b16 %v190
    %v344 = vunpack.c.h.b16 %v190
    %v345 = vunpack.c.l.b16 %v191
    %v346 = vunpack.c.h.b16 %v191
    %v347 = vunpack.c.l.b16 %v192
    %v348 = vunpack.c.h.b16 %v192
    %v349 = vunpack.c.l.b16 %v193
    %v350 = vunpack.c.h.b16 %v193
    %v351 = vunpack.c.l.b16 %v194
    %v352 = vunpack.c.h.b16 %v194
    %v353 = vunpack.c.l.b16 %v195
    %v354 = vunpack.c.h.b16 %v195
    %v355 = vunpack.c.l.b16 %v196
    %v356 = vunpack.c.h.b16 %v196
    %v357 = vunpack.c.l.b16 %v197
    %v358 = vunpack.c.h.b16 %v197
    %v359 = vunpack.c.l.b16 %v198
    %v360 = vunpack.c.h.b16 %v198
    %v361 = vunpack.c.l.b16 %v199
    %v362 = vunpack.c.h.b16 %v199
    %v363 = vunpack.c.l.b16 %v200
    %v364 = vunpack.c.h.b16 %v200
    %v365 = vunpack.c.l.b16 %v201
    %v366 = vunpack.c.h.b16 %v201
    %v367 = vunpack.c.l.b16 %v202
    %v368 = vunpack.c.h.b16 %v202
    %v369 = vunpack.c.l.b16 %v203
    %v370 = vunpack.c.h.b16 %v203
    %v371 = vunpack.c.l.b16 %v204
    %v372 = vunpack.c.h.b16 %v204
    %v373 = vunpack.c.l.b16 %v205
    %v374 = vunpack.c.h.b16 %v205
    %v375 = vunpack.c.l.b16 %v206
    %v376 = vunpack.c.h.b16 %v206
    %v377 = vunpack.c.l.b16 %v207
    %v378 = vunpack.c.h.b16 %v207
    %v379 = vunpack.c.l.b16 %v208
    %v380 = vunpack.c.h.b16 %v208
    %v381 = vunpack.c.l.b16 %v209
    %v382 = vunpack.c.h.b16 %v209
    %v383 = vunpack.c.l.b16 %v210
    %v384 = vunpack.c.h.b16 %v210
    %v385 = vunpack.c.l.b16 %v211
    %v386 = vunpack.c.h.b16 %v211
    %v387 = vunpack.c.l.b16 %v212
    %v388 = vunpack.c.h.b16 %v212
    %v389 = vunpack.c.l.b16 %v213
    %v390 = vunpack.c.h.b16 %v213
    %v391 = vunpack.c.l.b16 %v214
    %v392 = vunpack.c.h.b16 %v214
    %v393 = vunpack.c.l.b16 %v215
    %v394 = vunpack.c.h.b16 %v215
    %v395 = vunpack.c.l.b16 %v216
    %v396 = vunpack.c.h.b16 %v216
    %v397 = vunpack.c.l.b16 %v217
    %v398 = vunpack.c.h.b16 %v217
    %v399 = vunpack.c.l.b16 %v218
    %v400 = vunpack.c.h.b16 %v218
    %v401 = vunpack.c.l.b16 %v219
    %v402 = vunpack.c.h.b16 %v219
    %v403 = vunpack.c.l.b16 %v220
    %v404 = vunpack.c.h.b16 %v220
    %v405 = vunpack.c.l.b16 %v221
    %v406 = vunpack.c.h.b16 %v221
    %v407 = vunpack.c.l.b16 %v222
    %v408 = vunpack.c.h.b16 %v222
    %v409 = vunpack.c.l.b16 %v223
    %v410 = vunpack.c.h.b16 %v223
    %v411 = vunpack.c.l.b16 %v224
    %v412 = vunpack.c.h.b16 %v224
    %v413 = vunpack.c.l.b16 %v225
    %v414 = vunpack.c.h.b16 %v225
    %v415 = vunpack.c.l.b16 %v226
    %v416 = vunpack.c.h.b16 %v226
    %v417 = vunpack.c.l.b16 %v227
    %v418 = vunpack.c.h.b16 %v227
    %v419 = vunpack.c.l.b16 %v228
    %v420 = vunpack.c.h.b16 %v228
    %v421 = vunpack.c.l.b16 %v229
    %v422 = vunpack.c.h.b16 %v229
    %v423 = vunpack.c.l.b16 %v230
    %v424 = vunpack.c.h.b16 %v230
    %v425 = vunpack.c.l.b16 %v231
    %v426 = vunpack.c.h.b16 %v231
    %v427 = vunpack.c.l.b16 %v232
    %v428 = vunpack.c.h.b16 %v232
    %v429 = vunpack.c.l.b16 %v233
    %v430 = vunpack.c.h.b16 %v233
    %v431 = vunpack.c.l.b16 %v234
    %v432 = vunpack.c.h.b16 %v234
    %v433 = vunpack.c.l.b16 %v235
    %v434 = vunpack.c.h.b16 %v235
    %v435 = vunpack.c.l.b16 %v236
    %v436 = vunpack.c.h.b16 %v236
    %v437 = vunpack.c.l.b16 %v237
    %v438 = vunpack.c.h.b16 %v237
    %v439 = vunpack.c.l.b16 %v238
    %v440 = vunpack.c.h.b16 %v238
    %v441 = vunpack.c.l.b16 %v239
    %v442 = vunpack.c.h.b16 %v239
    %v443 = vunpack.c.l.b16 %v240
    %v444 = vunpack.c.h.b16 %v240
    %v445 = vunpack.c.l.b16 %v241
    %v446 = vunpack.c.h.b16 %v241
    %v447 = vunpack.c.l.b16 %v242
    %v448 = vunpack.c.h.b16 %v242
    %v449 = vunpack.c.l.b16 %v243
    %v450 = vunpack.c.h.b16 %v243
    %v451 = vunpack.c.l.b16 %v244
    %v452 = vunpack.c.h.b16 %v244
    %v453 = vunpack.c.l.b16 %v245
    %v454 = vunpack.c.h.b16 %v245
    %v455 = vunpack.c.l.b16 %v246
    %v456 = vunpack.c.h.b16 %v246
    %v457 = vunpack.c.l.b16 %v247
    %v458 = vunpack.c.h.b16 %v247
    %v459 = vunpack.c.l.b16 %v248
    %v460 = vunpack.c.h.b16 %v248
    %v461 = vunpack.c.l.b16 %v249
    %v462 = vunpack.c.h.b16 %v249
    %v463 = vunpack.c.l.b16 %v250
    %v464 = vunpack.c.h.b16 %v250
    %v465 = vpack.c.b16 %v341, %v337
    %v466 = vpack.c.b16 %v342, %v338
    %v467 = vpack.c.b16 %v343, %v339
    %v468 = vpack.c.b16 %v344, %v340
    %v469 = vpack.c.b16 %v349, %v345
    %v470 = vpack.c.b16 %v350, %v346
    %v471 = vpack.c.b16 %v351, %v347
    %v472 = vpack.c.b16 %v352, %v348
    %v473 = vpack.c.b16 %v357, %v353
    %v474 = vpack.c.b16 %v358, %v354
    %v475 = vpack.c.b16 %v359, %v355
    %v476 = vpack.c.b16 %v360, %v356
    %v477 = vpack.c.b16 %v365, %v361
    %v478 = vpack.c.b16 %v366, %v362
    %v479 = vpack.c.b16 %v367, %v363
    %v480 = vpack.c.b16 %v368, %v364
    %v481 = vpack.c.b16 %v373, %v369
    %v482 = vpack.c.b16 %v374, %v370
    %v483 = vpack.c.b16 %v375, %v371
    %v484 = vpack.c.b16 %v376, %v372
    %v485 = vpack.c.b16 %v381, %v377
    %v486 = vpack.c.b16 %v382, %v378
    %v487 = vpack.c.b16 %v383, %v379
    %v488 = vpack.c.b16 %v384, %v380
    %v489 = vpack.c.b16 %v389, %v385
    %v490 = vpack.c.b16 %v390, %v386
    %v491 = vpack.c.b16 %v391, %v387
    %v492 = vpack.c.b16 %v392, %v388
    %v493 = vpack.c.b16 %v397, %v393
    %v494 = vpack.c.b16 %v398, %v394
    %v495 = vpack.c.b16 %v399, %v395
    %v496 = vpack.c.b16 %v400, %v396
    %v497 = vpack.c.b16 %v405, %v401
    %v498 = vpack.c.b16 %v406, %v402
    %v499 = vpack.c.b16 %v407, %v403
    %v500 = vpack.c.b16 %v408, %v404
    %v501 = vpack.c.b16 %v413, %v409
    %v502 = vpack.c.b16 %v414, %v410
    %v503 = vpack.c.b16 %v415, %v411
    %v504 = vpack.c.b16 %v416, %v412
    %v505 = vpack.c.b16 %v421, %v417
    %v506 = vpack.c.b16 %v422, %v418
    %v507 = vpack.c.b16 %v423, %v419
    %v508 = vpack.c.b16 %v424, %v420
    %v509 = vpack.c.b16 %v429, %v425
    %v510 = vpack.c.b16 %v430, %v426
    %v511 = vpack.c.b16 %v431, %v427
    %v512 = vpack.c.b16 %v432, %v428
    %v513 = vpack.c.b16 %v437, %v433
    %v514 = vpack.c.b16 %v438, %v434
    %v515 = vpack.c.b16 %v439, %v435
    %v516 = vpack.c.b16 %v440, %v436
    %v517 = vpack.c.b16 %v445, %v441
    %v518 = vpack.c.b16 %v446, %v442
    %v519 = vpack.c.b16 %v447, %v443
    %v520 = vpack.c.b16 %v448, %v444
    %v521 = vpack.c.b16 %v453, %v449
    %v522 = vpack.c.b16 %v454, %v450
    %v523 = vpack.c.b16 %v455, %v451
    %v524 = vpack.c.b16 %v456, %v452
    %v525 = vpack.c.b16 %v461, %v457
    %v526 = vpack.c.b16 %v462, %v458
    %v527 = vpack.c.b16 %v463, %v459
    %v528 = vpack.c.b16 %v464, %v460
    %593 = vmatprep.subr.bf16.mxu0 %v494
    %594 = vmatpush1.bf16.msra.mxu0 %v493
    %595 = vmatprep.subr.bf16.mxu0 %v490
    %596 = vmatpush1.bf16.msra.mxu0 %v489
    %597 = vmatprep.subr.bf16.mxu0 %v486
    %598 = vmatpush1.bf16.msra.mxu0 %v485
    %599 = vmatprep.subr.bf16.mxu0 %v482
    %600 = vmatpush1.bf16.msra.mxu0 %v481
    %601 = vmatprep.subr.bf16.mxu0 %v478
    %602 = vmatpush1.bf16.msra.mxu0 %v477
    %603 = vmatprep.subr.bf16.mxu0 %v474
    %604 = vmatpush1.bf16.msra.mxu0 %v473
    %605 = vmatprep.subr.bf16.mxu0 %v470
    %606 = vmatpush1.bf16.msra.mxu0 %v469
    %607 = vmatprep.subr.bf16.mxu0 %v466
    %608 = vmatpush1.bf16.msra.mxu0 %v465
    %609 = vmatprep.subr.bf16.mxu0 %v526
    %610 = vmatpush2.bf16.msra.mxu0 %v525
    %611 = vmatprep.subr.bf16.mxu0 %v522
    %612 = vmatpush2.bf16.msra.mxu0 %v521
    %613 = vmatprep.subr.bf16.mxu0 %v518
    %614 = vmatpush2.bf16.msra.mxu0 %v517
    %615 = vmatprep.subr.bf16.mxu0 %v514
    %616 = vmatpush2.bf16.msra.mxu0 %v513
    %617 = vmatprep.subr.bf16.mxu0 %v510
    %618 = vmatpush2.bf16.msra.mxu0 %v509
    %619 = vmatprep.subr.bf16.mxu0 %v506
    %620 = vmatpush2.bf16.msra.mxu0 %v505
    %621 = vmatprep.subr.bf16.mxu0 %v502
    %622 = vmatpush2.bf16.msra.mxu0 %v501
    %623 = vmatprep.subr.bf16.mxu0 %v498
    %624 = vmatpush2.bf16.msra.mxu0 %v497
    %625 = vmatprep.mubr.bf16.mxu0 %v186
    %626 = vmatmul.mubr.bf16.gmra.mxu0 %v185
    %v627 = vpop.f32.mrf.mxu0
    %v628 = vadd.f32 %v256, %v627
    %v629 = vpop.f32.mrf.mxu0
    %v630 = vadd.f32 %v260, %v629
    %v631 = vpop.f32.mrf.mxu0
    %v632 = vpop.f32.mrf.mxu0
    %633 = vdwg.mxu0
    %634 = vmatprep.subr.bf16.mxu0 %v496
    %635 = vmatpush1.bf16.msra.mxu0 %v495
    %636 = vmatprep.subr.bf16.mxu0 %v492
    %637 = vmatpush1.bf16.msra.mxu0 %v491
    %638 = vmatprep.subr.bf16.mxu0 %v488
    %639 = vmatpush1.bf16.msra.mxu0 %v487
    %640 = vmatprep.subr.bf16.mxu0 %v484
    %641 = vmatpush1.bf16.msra.mxu0 %v483
    %642 = vmatprep.subr.bf16.mxu0 %v480
    %643 = vmatpush1.bf16.msra.mxu0 %v479
    %644 = vmatprep.subr.bf16.mxu0 %v476
    %645 = vmatpush1.bf16.msra.mxu0 %v475
    %646 = vmatprep.subr.bf16.mxu0 %v472
    %647 = vmatpush1.bf16.msra.mxu0 %v471
    %648 = vmatprep.subr.bf16.mxu0 %v468
    %649 = vmatpush1.bf16.msra.mxu0 %v467
    %650 = vmatprep.subr.bf16.mxu0 %v528
    %651 = vmatpush2.bf16.msra.mxu0 %v527
    %652 = vmatprep.subr.bf16.mxu0 %v524
    %653 = vmatpush2.bf16.msra.mxu0 %v523
    %654 = vmatprep.subr.bf16.mxu0 %v520
    %655 = vmatpush2.bf16.msra.mxu0 %v519
    %656 = vmatprep.subr.bf16.mxu0 %v516
    %657 = vmatpush2.bf16.msra.mxu0 %v515
    %658 = vmatprep.subr.bf16.mxu0 %v512
    %659 = vmatpush2.bf16.msra.mxu0 %v511
    %660 = vmatprep.subr.bf16.mxu0 %v508
    %661 = vmatpush2.bf16.msra.mxu0 %v507
    %662 = vmatprep.subr.bf16.mxu0 %v504
    %663 = vmatpush2.bf16.msra.mxu0 %v503
    %664 = vmatprep.subr.bf16.mxu0 %v500
    %665 = vmatpush2.bf16.msra.mxu0 %v499
    %666 = vmatprep.mubr.bf16.mxu0 %v186
    %667 = vmatmul.mubr.bf16.gmra.mxu0 %v185
    %v668 = vpop.f32.mrf.mxu0
    %v669 = vadd.f32 %v264, %v668
    %v670 = vpop.f32.mrf.mxu0
    %v671 = vadd.f32 %v268, %v670
    %v672 = vpop.f32.mrf.mxu0
    %v673 = vpop.f32.mrf.mxu0
    %674 = vdwg.mxu0
    %v675 = vmax.f32 %v628, 0.0
    %v676 = vmax.f32 %v630, 0.0
    %v677 = vmax.f32 %v669, 0.0
    %v678 = vmax.f32 %v671, 0.0
    %v679 = vpack.c.bf16 %v675, %v675
    %v680 = vpack.c.bf16 %v676, %v676
    %v681 = vpack.c.bf16 %v677, %v677
    %v682 = vpack.c.bf16 %v678, %v678
    %v683 = vld [vmem:[#allocation10] sm:$0xff]
    %v684 = vld [vmem:[#allocation10 + $0x8] sm:$0xff]
    %v685 = vld [vmem:[#allocation10 + $0x10] sm:$0xff]
    %v686 = vld [vmem:[#allocation10 + $0x18] sm:$0xff]
    %v687 = vld [vmem:[#allocation10 + $0x20] sm:$0xff]
    %v688 = vld [vmem:[#allocation10 + $0x28] sm:$0xff]
    %v689 = vld [vmem:[#allocation10 + $0x30] sm:$0xff]
    %v690 = vld [vmem:[#allocation10 + $0x38] sm:$0xff]
    %v691 = vld [vmem:[#allocation10 + $0x40] sm:$0xff]
    %v692 = vld [vmem:[#allocation10 + $0x48] sm:$0xff]
    %v693 = vld [vmem:[#allocation10 + $0x50] sm:$0xff]
    %v694 = vld [vmem:[#allocation10 + $0x58] sm:$0xff]
    %v695 = vld [vmem:[#allocation10 + $0x60] sm:$0xff]
    %v696 = vld [vmem:[#allocation10 + $0x68] sm:$0xff]
    %v697 = vld [vmem:[#allocation10 + $0x70] sm:$0xff]
    %v698 = vld [vmem:[#allocation10 + $0x78] sm:$0xff]
    %v699 = vld [vmem:[#allocation10 + $0x80] sm:$0xff]
    %v700 = vld [vmem:[#allocation10 + $0x88] sm:$0xff]
    %v701 = vld [vmem:[#allocation10 + $0x90] sm:$0xff]
    %v702 = vld [vmem:[#allocation10 + $0x98] sm:$0xff]
    %v703 = vld [vmem:[#allocation10 + $0xa0] sm:$0xff]
    %v704 = vld [vmem:[#allocation10 + $0xa8] sm:$0xff]
    %v705 = vld [vmem:[#allocation10 + $0xb0] sm:$0xff]
    %v706 = vld [vmem:[#allocation10 + $0xb8] sm:$0xff]
    %v707 = vld [vmem:[#allocation10 + $0xc0] sm:$0xff]
    %v708 = vld [vmem:[#allocation10 + $0xc8] sm:$0xff]
    %v709 = vld [vmem:[#allocation10 + $0xd0] sm:$0xff]
    %v710 = vld [vmem:[#allocation10 + $0xd8] sm:$0xff]
    %v711 = vld [vmem:[#allocation10 + $0xe0] sm:$0xff]
    %v712 = vld [vmem:[#allocation10 + $0xe8] sm:$0xff]
    %v713 = vld [vmem:[#allocation10 + $0xf0] sm:$0xff]
    %v714 = vld [vmem:[#allocation10 + $0xf8] sm:$0xff]
    %v715 = vld [vmem:[#allocation10 + $0x100] sm:$0xff]
    %v716 = vld [vmem:[#allocation10 + $0x108] sm:$0xff]
    %v717 = vld [vmem:[#allocation10 + $0x110] sm:$0xff]
    %v718 = vld [vmem:[#allocation10 + $0x118] sm:$0xff]
    %v719 = vld [vmem:[#allocation10 + $0x120] sm:$0xff]
    %v720 = vld [vmem:[#allocation10 + $0x128] sm:$0xff]
    %v721 = vld [vmem:[#allocation10 + $0x130] sm:$0xff]
    %v722 = vld [vmem:[#allocation10 + $0x138] sm:$0xff]
    %v723 = vld [vmem:[#allocation10 + $0x140] sm:$0xff]
    %v724 = vld [vmem:[#allocation10 + $0x148] sm:$0xff]
    %v725 = vld [vmem:[#allocation10 + $0x150] sm:$0xff]
    %v726 = vld [vmem:[#allocation10 + $0x158] sm:$0xff]
    %v727 = vld [vmem:[#allocation10 + $0x160] sm:$0xff]
    %v728 = vld [vmem:[#allocation10 + $0x168] sm:$0xff]
    %v729 = vld [vmem:[#allocation10 + $0x170] sm:$0xff]
    %v730 = vld [vmem:[#allocation10 + $0x178] sm:$0xff]
    %v731 = vld [vmem:[#allocation10 + $0x180] sm:$0xff]
    %v732 = vld [vmem:[#allocation10 + $0x188] sm:$0xff]
    %v733 = vld [vmem:[#allocation10 + $0x190] sm:$0xff]
    %v734 = vld [vmem:[#allocation10 + $0x198] sm:$0xff]
    %v735 = vld [vmem:[#allocation10 + $0x1a0] sm:$0xff]
    %v736 = vld [vmem:[#allocation10 + $0x1a8] sm:$0xff]
    %v737 = vld [vmem:[#allocation10 + $0x1b0] sm:$0xff]
    %v738 = vld [vmem:[#allocation10 + $0x1b8] sm:$0xff]
    %v739 = vld [vmem:[#allocation10 + $0x1c0] sm:$0xff]
    %v740 = vld [vmem:[#allocation10 + $0x1c8] sm:$0xff]
    %v741 = vld [vmem:[#allocation10 + $0x1d0] sm:$0xff]
    %v742 = vld [vmem:[#allocation10 + $0x1d8] sm:$0xff]
    %v743 = vld [vmem:[#allocation10 + $0x1e0] sm:$0xff]
    %v744 = vld [vmem:[#allocation10 + $0x1e8] sm:$0xff]
    %v745 = vld [vmem:[#allocation10 + $0x1f0] sm:$0xff]
    %v746 = vld [vmem:[#allocation10 + $0x1f8] sm:$0xff]
    %v747 = vld [vmem:[#allocation10 + $0x200] sm:$0xff]
    %v748 = vld [vmem:[#allocation10 + $0x208] sm:$0xff]
    %v749 = vld [vmem:[#allocation10 + $0x210] sm:$0xff]
    %v750 = vld [vmem:[#allocation10 + $0x218] sm:$0xff]
    %v751 = vld [vmem:[#allocation10 + $0x220] sm:$0xff]
    %v752 = vld [vmem:[#allocation10 + $0x228] sm:$0xff]
    %v753 = vld [vmem:[#allocation10 + $0x230] sm:$0xff]
    %v754 = vld [vmem:[#allocation10 + $0x238] sm:$0xff]
    %v755 = vld [vmem:[#allocation10 + $0x240] sm:$0xff]
    %v756 = vld [vmem:[#allocation10 + $0x248] sm:$0xff]
    %v757 = vld [vmem:[#allocation10 + $0x250] sm:$0xff]
    %v758 = vld [vmem:[#allocation10 + $0x258] sm:$0xff]
    %v759 = vld [vmem:[#allocation10 + $0x260] sm:$0xff]
    %v760 = vld [vmem:[#allocation10 + $0x268] sm:$0xff]
    %v761 = vld [vmem:[#allocation10 + $0x270] sm:$0xff]
    %v762 = vld [vmem:[#allocation10 + $0x278] sm:$0xff]
    %v763 = vld [vmem:[#allocation10 + $0x280] sm:$0xff]
    %v764 = vld [vmem:[#allocation10 + $0x288] sm:$0xff]
    %v765 = vld [vmem:[#allocation10 + $0x290] sm:$0xff]
    %v766 = vld [vmem:[#allocation10 + $0x298] sm:$0xff]
    %v767 = vld [vmem:[#allocation10 + $0x2a0] sm:$0xff]
    %v768 = vld [vmem:[#allocation10 + $0x2a8] sm:$0xff]
    %v769 = vld [vmem:[#allocation10 + $0x2b0] sm:$0xff]
    %v770 = vld [vmem:[#allocation10 + $0x2b8] sm:$0xff]
    %v771 = vld [vmem:[#allocation10 + $0x2c0] sm:$0xff]
    %v772 = vld [vmem:[#allocation10 + $0x2c8] sm:$0xff]
    %v773 = vld [vmem:[#allocation10 + $0x2d0] sm:$0xff]
    %v774 = vld [vmem:[#allocation10 + $0x2d8] sm:$0xff]
    %v775 = vld [vmem:[#allocation10 + $0x2e0] sm:$0xff]
    %v776 = vld [vmem:[#allocation10 + $0x2e8] sm:$0xff]
    %v777 = vld [vmem:[#allocation10 + $0x2f0] sm:$0xff]
    %v778 = vld [vmem:[#allocation10 + $0x2f8] sm:$0xff]
    %v779 = vld [vmem:[#allocation10 + $0x300] sm:$0xff]
    %v780 = vld [vmem:[#allocation10 + $0x308] sm:$0xff]
    %v781 = vld [vmem:[#allocation10 + $0x310] sm:$0xff]
    %v782 = vld [vmem:[#allocation10 + $0x318] sm:$0xff]
    %v783 = vld [vmem:[#allocation10 + $0x320] sm:$0xff]
    %v784 = vld [vmem:[#allocation10 + $0x328] sm:$0xff]
    %v785 = vld [vmem:[#allocation10 + $0x330] sm:$0xff]
    %v786 = vld [vmem:[#allocation10 + $0x338] sm:$0xff]
    %v787 = vld [vmem:[#allocation10 + $0x340] sm:$0xff]
    %v788 = vld [vmem:[#allocation10 + $0x348] sm:$0xff]
    %v789 = vld [vmem:[#allocation10 + $0x350] sm:$0xff]
    %v790 = vld [vmem:[#allocation10 + $0x358] sm:$0xff]
    %v791 = vld [vmem:[#allocation10 + $0x360] sm:$0xff]
    %v792 = vld [vmem:[#allocation10 + $0x368] sm:$0xff]
    %v793 = vld [vmem:[#allocation10 + $0x370] sm:$0xff]
    %v794 = vld [vmem:[#allocation10 + $0x378] sm:$0xff]
    %v795 = vld [vmem:[#allocation10 + $0x380] sm:$0xff]
    %v796 = vld [vmem:[#allocation10 + $0x388] sm:$0xff]
    %v797 = vld [vmem:[#allocation10 + $0x390] sm:$0xff]
    %v798 = vld [vmem:[#allocation10 + $0x398] sm:$0xff]
    %v799 = vld [vmem:[#allocation10 + $0x3a0] sm:$0xff]
    %v800 = vld [vmem:[#allocation10 + $0x3a8] sm:$0xff]
    %v801 = vld [vmem:[#allocation10 + $0x3b0] sm:$0xff]
    %v802 = vld [vmem:[#allocation10 + $0x3b8] sm:$0xff]
    %v803 = vld [vmem:[#allocation10 + $0x3c0] sm:$0xff]
    %v804 = vld [vmem:[#allocation10 + $0x3c8] sm:$0xff]
    %v805 = vld [vmem:[#allocation10 + $0x3d0] sm:$0xff]
    %v806 = vld [vmem:[#allocation10 + $0x3d8] sm:$0xff]
    %v807 = vld [vmem:[#allocation10 + $0x3e0] sm:$0xff]
    %v808 = vld [vmem:[#allocation10 + $0x3e8] sm:$0xff]
    %v809 = vld [vmem:[#allocation10 + $0x3f0] sm:$0xff]
    %v810 = vld [vmem:[#allocation10 + $0x3f8] sm:$0xff]
    %v811 = vld [vmem:[#allocation10 + $0x400] sm:$0xff]
    %v812 = vld [vmem:[#allocation10 + $0x408] sm:$0xff]
    %v813 = vld [vmem:[#allocation10 + $0x410] sm:$0xff]
    %v814 = vld [vmem:[#allocation10 + $0x418] sm:$0xff]
    %v815 = vld [vmem:[#allocation10 + $0x420] sm:$0xff]
    %v816 = vld [vmem:[#allocation10 + $0x428] sm:$0xff]
    %v817 = vld [vmem:[#allocation10 + $0x430] sm:$0xff]
    %v818 = vld [vmem:[#allocation10 + $0x438] sm:$0xff]
    %v819 = vld [vmem:[#allocation10 + $0x440] sm:$0xff]
    %v820 = vld [vmem:[#allocation10 + $0x448] sm:$0xff]
    %v821 = vld [vmem:[#allocation10 + $0x450] sm:$0xff]
    %v822 = vld [vmem:[#allocation10 + $0x458] sm:$0xff]
    %v823 = vld [vmem:[#allocation10 + $0x460] sm:$0xff]
    %v824 = vld [vmem:[#allocation10 + $0x468] sm:$0xff]
    %v825 = vld [vmem:[#allocation10 + $0x470] sm:$0xff]
    %v826 = vld [vmem:[#allocation10 + $0x478] sm:$0xff]
    %v827 = vld [vmem:[#allocation10 + $0x480] sm:$0xff]
    %v828 = vld [vmem:[#allocation10 + $0x488] sm:$0xff]
    %v829 = vld [vmem:[#allocation10 + $0x490] sm:$0xff]
    %v830 = vld [vmem:[#allocation10 + $0x498] sm:$0xff]
    %v831 = vld [vmem:[#allocation10 + $0x4a0] sm:$0xff]
    %v832 = vld [vmem:[#allocation10 + $0x4a8] sm:$0xff]
    %v833 = vld [vmem:[#allocation10 + $0x4b0] sm:$0xff]
    %v834 = vld [vmem:[#allocation10 + $0x4b8] sm:$0xff]
    %v835 = vld [vmem:[#allocation10 + $0x4c0] sm:$0xff]
    %v836 = vld [vmem:[#allocation10 + $0x4c8] sm:$0xff]
    %v837 = vld [vmem:[#allocation10 + $0x4d0] sm:$0xff]
    %v838 = vld [vmem:[#allocation10 + $0x4d8] sm:$0xff]
    %v839 = vld [vmem:[#allocation10 + $0x4e0] sm:$0xff]
    %v840 = vld [vmem:[#allocation10 + $0x4e8] sm:$0xff]
    %v841 = vld [vmem:[#allocation10 + $0x4f0] sm:$0xff]
    %v842 = vld [vmem:[#allocation10 + $0x4f8] sm:$0xff]
    %v843 = vld [vmem:[#allocation10 + $0x500] sm:$0xff]
    %v844 = vld [vmem:[#allocation10 + $0x508] sm:$0xff]
    %v845 = vld [vmem:[#allocation10 + $0x510] sm:$0xff]
    %v846 = vld [vmem:[#allocation10 + $0x518] sm:$0xff]
    %v847 = vld [vmem:[#allocation10 + $0x520] sm:$0xff]
    %v848 = vld [vmem:[#allocation10 + $0x528] sm:$0xff]
    %v849 = vld [vmem:[#allocation10 + $0x530] sm:$0xff]
    %v850 = vld [vmem:[#allocation10 + $0x538] sm:$0xff]
    %v851 = vld [vmem:[#allocation10 + $0x540] sm:$0xff]
    %v852 = vld [vmem:[#allocation10 + $0x548] sm:$0xff]
    %v853 = vld [vmem:[#allocation10 + $0x550] sm:$0xff]
    %v854 = vld [vmem:[#allocation10 + $0x558] sm:$0xff]
    %v855 = vld [vmem:[#allocation10 + $0x560] sm:$0xff]
    %v856 = vld [vmem:[#allocation10 + $0x568] sm:$0xff]
    %v857 = vld [vmem:[#allocation10 + $0x570] sm:$0xff]
    %v858 = vld [vmem:[#allocation10 + $0x578] sm:$0xff]
    %v859 = vld [vmem:[#allocation10 + $0x580] sm:$0xff]
    %v860 = vld [vmem:[#allocation10 + $0x588] sm:$0xff]
    %v861 = vld [vmem:[#allocation10 + $0x590] sm:$0xff]
    %v862 = vld [vmem:[#allocation10 + $0x598] sm:$0xff]
    %v863 = vld [vmem:[#allocation10 + $0x5a0] sm:$0xff]
    %v864 = vld [vmem:[#allocation10 + $0x5a8] sm:$0xff]
    %v865 = vld [vmem:[#allocation10 + $0x5b0] sm:$0xff]
    %v866 = vld [vmem:[#allocation10 + $0x5b8] sm:$0xff]
    %v867 = vld [vmem:[#allocation10 + $0x5c0] sm:$0xff]
    %v868 = vld [vmem:[#allocation10 + $0x5c8] sm:$0xff]
    %v869 = vld [vmem:[#allocation10 + $0x5d0] sm:$0xff]
    %v870 = vld [vmem:[#allocation10 + $0x5d8] sm:$0xff]
    %v871 = vld [vmem:[#allocation10 + $0x5e0] sm:$0xff]
    %v872 = vld [vmem:[#allocation10 + $0x5e8] sm:$0xff]
    %v873 = vld [vmem:[#allocation10 + $0x5f0] sm:$0xff]
    %v874 = vld [vmem:[#allocation10 + $0x5f8] sm:$0xff]
    %v875 = vld [vmem:[#allocation10 + $0x600] sm:$0xff]
    %v876 = vld [vmem:[#allocation10 + $0x608] sm:$0xff]
    %v877 = vld [vmem:[#allocation10 + $0x610] sm:$0xff]
    %v878 = vld [vmem:[#allocation10 + $0x618] sm:$0xff]
    %v879 = vld [vmem:[#allocation10 + $0x620] sm:$0xff]
    %v880 = vld [vmem:[#allocation10 + $0x628] sm:$0xff]
    %v881 = vld [vmem:[#allocation10 + $0x630] sm:$0xff]
    %v882 = vld [vmem:[#allocation10 + $0x638] sm:$0xff]
    %v883 = vld [vmem:[#allocation10 + $0x640] sm:$0xff]
    %v884 = vld [vmem:[#allocation10 + $0x648] sm:$0xff]
    %v885 = vld [vmem:[#allocation10 + $0x650] sm:$0xff]
    %v886 = vld [vmem:[#allocation10 + $0x658] sm:$0xff]
    %v887 = vld [vmem:[#allocation10 + $0x660] sm:$0xff]
    %v888 = vld [vmem:[#allocation10 + $0x668] sm:$0xff]
    %v889 = vld [vmem:[#allocation10 + $0x670] sm:$0xff]
    %v890 = vld [vmem:[#allocation10 + $0x678] sm:$0xff]
    %v891 = vld [vmem:[#allocation10 + $0x680] sm:$0xff]
    %v892 = vld [vmem:[#allocation10 + $0x688] sm:$0xff]
    %v893 = vld [vmem:[#allocation10 + $0x690] sm:$0xff]
    %v894 = vld [vmem:[#allocation10 + $0x698] sm:$0xff]
    %v895 = vld [vmem:[#allocation10 + $0x6a0] sm:$0xff]
    %v896 = vld [vmem:[#allocation10 + $0x6a8] sm:$0xff]
    %v897 = vld [vmem:[#allocation10 + $0x6b0] sm:$0xff]
    %v898 = vld [vmem:[#allocation10 + $0x6b8] sm:$0xff]
    %v899 = vld [vmem:[#allocation10 + $0x6c0] sm:$0xff]
    %v900 = vld [vmem:[#allocation10 + $0x6c8] sm:$0xff]
    %v901 = vld [vmem:[#allocation10 + $0x6d0] sm:$0xff]
    %v902 = vld [vmem:[#allocation10 + $0x6d8] sm:$0xff]
    %v903 = vld [vmem:[#allocation10 + $0x6e0] sm:$0xff]
    %v904 = vld [vmem:[#allocation10 + $0x6e8] sm:$0xff]
    %v905 = vld [vmem:[#allocation10 + $0x6f0] sm:$0xff]
    %v906 = vld [vmem:[#allocation10 + $0x6f8] sm:$0xff]
    %v907 = vld [vmem:[#allocation10 + $0x700] sm:$0xff]
    %v908 = vld [vmem:[#allocation10 + $0x708] sm:$0xff]
    %v909 = vld [vmem:[#allocation10 + $0x710] sm:$0xff]
    %v910 = vld [vmem:[#allocation10 + $0x718] sm:$0xff]
    %v911 = vld [vmem:[#allocation10 + $0x720] sm:$0xff]
    %v912 = vld [vmem:[#allocation10 + $0x728] sm:$0xff]
    %v913 = vld [vmem:[#allocation10 + $0x730] sm:$0xff]
    %v914 = vld [vmem:[#allocation10 + $0x738] sm:$0xff]
    %v915 = vld [vmem:[#allocation10 + $0x740] sm:$0xff]
    %v916 = vld [vmem:[#allocation10 + $0x748] sm:$0xff]
    %v917 = vld [vmem:[#allocation10 + $0x750] sm:$0xff]
    %v918 = vld [vmem:[#allocation10 + $0x758] sm:$0xff]
    %v919 = vld [vmem:[#allocation10 + $0x760] sm:$0xff]
    %v920 = vld [vmem:[#allocation10 + $0x768] sm:$0xff]
    %v921 = vld [vmem:[#allocation10 + $0x770] sm:$0xff]
    %v922 = vld [vmem:[#allocation10 + $0x778] sm:$0xff]
    %v923 = vld [vmem:[#allocation10 + $0x780] sm:$0xff]
    %v924 = vld [vmem:[#allocation10 + $0x788] sm:$0xff]
    %v925 = vld [vmem:[#allocation10 + $0x790] sm:$0xff]
    %v926 = vld [vmem:[#allocation10 + $0x798] sm:$0xff]
    %v927 = vld [vmem:[#allocation10 + $0x7a0] sm:$0xff]
    %v928 = vld [vmem:[#allocation10 + $0x7a8] sm:$0xff]
    %v929 = vld [vmem:[#allocation10 + $0x7b0] sm:$0xff]
    %v930 = vld [vmem:[#allocation10 + $0x7b8] sm:$0xff]
    %v931 = vld [vmem:[#allocation10 + $0x7c0] sm:$0xff]
    %v932 = vld [vmem:[#allocation10 + $0x7c8] sm:$0xff]
    %v933 = vld [vmem:[#allocation10 + $0x7d0] sm:$0xff]
    %v934 = vld [vmem:[#allocation10 + $0x7d8] sm:$0xff]
    %v935 = vld [vmem:[#allocation10 + $0x7e0] sm:$0xff]
    %v936 = vld [vmem:[#allocation10 + $0x7e8] sm:$0xff]
    %v937 = vld [vmem:[#allocation10 + $0x7f0] sm:$0xff]
    %v938 = vld [vmem:[#allocation10 + $0x7f8] sm:$0xff]
    %v939 = vld [vmem:[%s6] sm:$0xff]
    %v941 = vlaneseq
    %v942 = vshrl.u32 %v941, 7
    %v943 = vsub.s32 0, %v942
    %v944 = vrot.slane %v939, %v943
    %v945 = vlaneseq
    %v946 = vshrl.u32 %v945, 7
    %v947 = vsub.s32 1, %v946
    %v948 = vrot.slane %v939, %v947
    %v949 = vlaneseq
    %v950 = vshrl.u32 %v949, 7
    %v951 = vsub.s32 2, %v950
    %v952 = vrot.slane %v939, %v951
    %v953 = vlaneseq
    %v954 = vshrl.u32 %v953, 7
    %v955 = vsub.s32 3, %v954
    %v956 = vrot.slane %v939, %v955
    %v957 = vlaneseq
    %v958 = vshrl.u32 %v957, 7
    %v959 = vsub.s32 4, %v958
    %v960 = vrot.slane %v939, %v959
    %v961 = vlaneseq
    %v962 = vshrl.u32 %v961, 7
    %v963 = vsub.s32 5, %v962
    %v964 = vrot.slane %v939, %v963
    %v965 = vlaneseq
    %v966 = vshrl.u32 %v965, 7
    %v967 = vsub.s32 6, %v966
    %v968 = vrot.slane %v939, %v967
    %v969 = vlaneseq
    %v970 = vshrl.u32 %v969, 7
    %v971 = vsub.s32 7, %v970
    %v972 = vrot.slane %v939, %v971
    %v1237 = vunpack.c.l.b16 %v683
    %v1238 = vunpack.c.h.b16 %v683
    %v1239 = vunpack.c.l.b16 %v684
    %v1240 = vunpack.c.h.b16 %v684
    %v1241 = vunpack.c.l.b16 %v685
    %v1242 = vunpack.c.h.b16 %v685
    %v1243 = vunpack.c.l.b16 %v686
    %v1244 = vunpack.c.h.b16 %v686
    %v1245 = vunpack.c.l.b16 %v687
    %v1246 = vunpack.c.h.b16 %v687
    %v1247 = vunpack.c.l.b16 %v688
    %v1248 = vunpack.c.h.b16 %v688
    %v1249 = vunpack.c.l.b16 %v689
    %v1250 = vunpack.c.h.b16 %v689
    %v1251 = vunpack.c.l.b16 %v690
    %v1252 = vunpack.c.h.b16 %v690
    %v1253 = vunpack.c.l.b16 %v691
    %v1254 = vunpack.c.h.b16 %v691
    %v1255 = vunpack.c.l.b16 %v692
    %v1256 = vunpack.c.h.b16 %v692
    %v1257 = vunpack.c.l.b16 %v693
    %v1258 = vunpack.c.h.b16 %v693
    %v1259 = vunpack.c.l.b16 %v694
    %v1260 = vunpack.c.h.b16 %v694
    %v1261 = vunpack.c.l.b16 %v695
    %v1262 = vunpack.c.h.b16 %v695
    %v1263 = vunpack.c.l.b16 %v696
    %v1264 = vunpack.c.h.b16 %v696
    %v1265 = vunpack.c.l.b16 %v697
    %v1266 = vunpack.c.h.b16 %v697
    %v1267 = vunpack.c.l.b16 %v698
    %v1268 = vunpack.c.h.b16 %v698
    %v1269 = vunpack.c.l.b16 %v699
    %v1270 = vunpack.c.h.b16 %v699
    %v1271 = vunpack.c.l.b16 %v700
    %v1272 = vunpack.c.h.b16 %v700
    %v1273 = vunpack.c.l.b16 %v701
    %v1274 = vunpack.c.h.b16 %v701
    %v1275 = vunpack.c.l.b16 %v702
    %v1276 = vunpack.c.h.b16 %v702
    %v1277 = vunpack.c.l.b16 %v703
    %v1278 = vunpack.c.h.b16 %v703
    %v1279 = vunpack.c.l.b16 %v704
    %v1280 = vunpack.c.h.b16 %v704
    %v1281 = vunpack.c.l.b16 %v705
    %v1282 = vunpack.c.h.b16 %v705
    %v1283 = vunpack.c.l.b16 %v706
    %v1284 = vunpack.c.h.b16 %v706
    %v1285 = vunpack.c.l.b16 %v707
    %v1286 = vunpack.c.h.b16 %v707
    %v1287 = vunpack.c.l.b16 %v708
    %v1288 = vunpack.c.h.b16 %v708
    %v1289 = vunpack.c.l.b16 %v709
    %v1290 = vunpack.c.h.b16 %v709
    %v1291 = vunpack.c.l.b16 %v710
    %v1292 = vunpack.c.h.b16 %v710
    %v1293 = vunpack.c.l.b16 %v711
    %v1294 = vunpack.c.h.b16 %v711
    %v1295 = vunpack.c.l.b16 %v712
    %v1296 = vunpack.c.h.b16 %v712
    %v1297 = vunpack.c.l.b16 %v713
    %v1298 = vunpack.c.h.b16 %v713
    %v1299 = vunpack.c.l.b16 %v714
    %v1300 = vunpack.c.h.b16 %v714
    %v1301 = vunpack.c.l.b16 %v715
    %v1302 = vunpack.c.h.b16 %v715
    %v1303 = vunpack.c.l.b16 %v716
    %v1304 = vunpack.c.h.b16 %v716
    %v1305 = vunpack.c.l.b16 %v717
    %v1306 = vunpack.c.h.b16 %v717
    %v1307 = vunpack.c.l.b16 %v718
    %v1308 = vunpack.c.h.b16 %v718
    %v1309 = vunpack.c.l.b16 %v719
    %v1310 = vunpack.c.h.b16 %v719
    %v1311 = vunpack.c.l.b16 %v720
    %v1312 = vunpack.c.h.b16 %v720
    %v1313 = vunpack.c.l.b16 %v721
    %v1314 = vunpack.c.h.b16 %v721
    %v1315 = vunpack.c.l.b16 %v722
    %v1316 = vunpack.c.h.b16 %v722
    %v1317 = vunpack.c.l.b16 %v723
    %v1318 = vunpack.c.h.b16 %v723
    %v1319 = vunpack.c.l.b16 %v724
    %v1320 = vunpack.c.h.b16 %v724
    %v1321 = vunpack.c.l.b16 %v725
    %v1322 = vunpack.c.h.b16 %v725
    %v1323 = vunpack.c.l.b16 %v726
    %v1324 = vunpack.c.h.b16 %v726
    %v1325 = vunpack.c.l.b16 %v727
    %v1326 = vunpack.c.h.b16 %v727
    %v1327 = vunpack.c.l.b16 %v728
    %v1328 = vunpack.c.h.b16 %v728
    %v1329 = vunpack.c.l.b16 %v729
    %v1330 = vunpack.c.h.b16 %v729
    %v1331 = vunpack.c.l.b16 %v730
    %v1332 = vunpack.c.h.b16 %v730
    %v1333 = vunpack.c.l.b16 %v731
    %v1334 = vunpack.c.h.b16 %v731
    %v1335 = vunpack.c.l.b16 %v732
    %v1336 = vunpack.c.h.b16 %v732
    %v1337 = vunpack.c.l.b16 %v733
    %v1338 = vunpack.c.h.b16 %v733
    %v1339 = vunpack.c.l.b16 %v734
    %v1340 = vunpack.c.h.b16 %v734
    %v1341 = vunpack.c.l.b16 %v735
    %v1342 = vunpack.c.h.b16 %v735
    %v1343 = vunpack.c.l.b16 %v736
    %v1344 = vunpack.c.h.b16 %v736
    %v1345 = vunpack.c.l.b16 %v737
    %v1346 = vunpack.c.h.b16 %v737
    %v1347 = vunpack.c.l.b16 %v738
    %v1348 = vunpack.c.h.b16 %v738
    %v1349 = vunpack.c.l.b16 %v739
    %v1350 = vunpack.c.h.b16 %v739
    %v1351 = vunpack.c.l.b16 %v740
    %v1352 = vunpack.c.h.b16 %v740
    %v1353 = vunpack.c.l.b16 %v741
    %v1354 = vunpack.c.h.b16 %v741
    %v1355 = vunpack.c.l.b16 %v742
    %v1356 = vunpack.c.h.b16 %v742
    %v1357 = vunpack.c.l.b16 %v743
    %v1358 = vunpack.c.h.b16 %v743
    %v1359 = vunpack.c.l.b16 %v744
    %v1360 = vunpack.c.h.b16 %v744
    %v1361 = vunpack.c.l.b16 %v745
    %v1362 = vunpack.c.h.b16 %v745
    %v1363 = vunpack.c.l.b16 %v746
    %v1364 = vunpack.c.h.b16 %v746
    %v1365 = vunpack.c.l.b16 %v747
    %v1366 = vunpack.c.h.b16 %v747
    %v1367 = vunpack.c.l.b16 %v748
    %v1368 = vunpack.c.h.b16 %v748
    %v1369 = vunpack.c.l.b16 %v749
    %v1370 = vunpack.c.h.b16 %v749
    %v1371 = vunpack.c.l.b16 %v750
    %v1372 = vunpack.c.h.b16 %v750
    %v1373 = vunpack.c.l.b16 %v751
    %v1374 = vunpack.c.h.b16 %v751
    %v1375 = vunpack.c.l.b16 %v752
    %v1376 = vunpack.c.h.b16 %v752
    %v1377 = vunpack.c.l.b16 %v753
    %v1378 = vunpack.c.h.b16 %v753
    %v1379 = vunpack.c.l.b16 %v754
    %v1380 = vunpack.c.h.b16 %v754
    %v1381 = vunpack.c.l.b16 %v755
    %v1382 = vunpack.c.h.b16 %v755
    %v1383 = vunpack.c.l.b16 %v756
    %v1384 = vunpack.c.h.b16 %v756
    %v1385 = vunpack.c.l.b16 %v757
    %v1386 = vunpack.c.h.b16 %v757
    %v1387 = vunpack.c.l.b16 %v758
    %v1388 = vunpack.c.h.b16 %v758
    %v1389 = vunpack.c.l.b16 %v759
    %v1390 = vunpack.c.h.b16 %v759
    %v1391 = vunpack.c.l.b16 %v760
    %v1392 = vunpack.c.h.b16 %v760
    %v1393 = vunpack.c.l.b16 %v761
    %v1394 = vunpack.c.h.b16 %v761
    %v1395 = vunpack.c.l.b16 %v762
    %v1396 = vunpack.c.h.b16 %v762
    %v1397 = vunpack.c.l.b16 %v763
    %v1398 = vunpack.c.h.b16 %v763
    %v1399 = vunpack.c.l.b16 %v764
    %v1400 = vunpack.c.h.b16 %v764
    %v1401 = vunpack.c.l.b16 %v765
    %v1402 = vunpack.c.h.b16 %v765
    %v1403 = vunpack.c.l.b16 %v766
    %v1404 = vunpack.c.h.b16 %v766
    %v1405 = vunpack.c.l.b16 %v767
    %v1406 = vunpack.c.h.b16 %v767
    %v1407 = vunpack.c.l.b16 %v768
    %v1408 = vunpack.c.h.b16 %v768
    %v1409 = vunpack.c.l.b16 %v769
    %v1410 = vunpack.c.h.b16 %v769
    %v1411 = vunpack.c.l.b16 %v770
    %v1412 = vunpack.c.h.b16 %v770
    %v1413 = vunpack.c.l.b16 %v771
    %v1414 = vunpack.c.h.b16 %v771
    %v1415 = vunpack.c.l.b16 %v772
    %v1416 = vunpack.c.h.b16 %v772
    %v1417 = vunpack.c.l.b16 %v773
    %v1418 = vunpack.c.h.b16 %v773
    %v1419 = vunpack.c.l.b16 %v774
    %v1420 = vunpack.c.h.b16 %v774
    %v1421 = vunpack.c.l.b16 %v775
    %v1422 = vunpack.c.h.b16 %v775
    %v1423 = vunpack.c.l.b16 %v776
    %v1424 = vunpack.c.h.b16 %v776
    %v1425 = vunpack.c.l.b16 %v777
    %v1426 = vunpack.c.h.b16 %v777
    %v1427 = vunpack.c.l.b16 %v778
    %v1428 = vunpack.c.h.b16 %v778
    %v1429 = vunpack.c.l.b16 %v779
    %v1430 = vunpack.c.h.b16 %v779
    %v1431 = vunpack.c.l.b16 %v780
    %v1432 = vunpack.c.h.b16 %v780
    %v1433 = vunpack.c.l.b16 %v781
    %v1434 = vunpack.c.h.b16 %v781
    %v1435 = vunpack.c.l.b16 %v782
    %v1436 = vunpack.c.h.b16 %v782
    %v1437 = vunpack.c.l.b16 %v783
    %v1438 = vunpack.c.h.b16 %v783
    %v1439 = vunpack.c.l.b16 %v784
    %v1440 = vunpack.c.h.b16 %v784
    %v1441 = vunpack.c.l.b16 %v785
    %v1442 = vunpack.c.h.b16 %v785
    %v1443 = vunpack.c.l.b16 %v786
    %v1444 = vunpack.c.h.b16 %v786
    %v1445 = vunpack.c.l.b16 %v787
    %v1446 = vunpack.c.h.b16 %v787
    %v1447 = vunpack.c.l.b16 %v788
    %v1448 = vunpack.c.h.b16 %v788
    %v1449 = vunpack.c.l.b16 %v789
    %v1450 = vunpack.c.h.b16 %v789
    %v1451 = vunpack.c.l.b16 %v790
    %v1452 = vunpack.c.h.b16 %v790
    %v1453 = vunpack.c.l.b16 %v791
    %v1454 = vunpack.c.h.b16 %v791
    %v1455 = vunpack.c.l.b16 %v792
    %v1456 = vunpack.c.h.b16 %v792
    %v1457 = vunpack.c.l.b16 %v793
    %v1458 = vunpack.c.h.b16 %v793
    %v1459 = vunpack.c.l.b16 %v794
    %v1460 = vunpack.c.h.b16 %v794
    %v1461 = vunpack.c.l.b16 %v795
    %v1462 = vunpack.c.h.b16 %v795
    %v1463 = vunpack.c.l.b16 %v796
    %v1464 = vunpack.c.h.b16 %v796
    %v1465 = vunpack.c.l.b16 %v797
    %v1466 = vunpack.c.h.b16 %v797
    %v1467 = vunpack.c.l.b16 %v798
    %v1468 = vunpack.c.h.b16 %v798
    %v1469 = vunpack.c.l.b16 %v799
    %v1470 = vunpack.c.h.b16 %v799
    %v1471 = vunpack.c.l.b16 %v800
    %v1472 = vunpack.c.h.b16 %v800
    %v1473 = vunpack.c.l.b16 %v801
    %v1474 = vunpack.c.h.b16 %v801
    %v1475 = vunpack.c.l.b16 %v802
    %v1476 = vunpack.c.h.b16 %v802
    %v1477 = vunpack.c.l.b16 %v803
    %v1478 = vunpack.c.h.b16 %v803
    %v1479 = vunpack.c.l.b16 %v804
    %v1480 = vunpack.c.h.b16 %v804
    %v1481 = vunpack.c.l.b16 %v805
    %v1482 = vunpack.c.h.b16 %v805
    %v1483 = vunpack.c.l.b16 %v806
    %v1484 = vunpack.c.h.b16 %v806
    %v1485 = vunpack.c.l.b16 %v807
    %v1486 = vunpack.c.h.b16 %v807
    %v1487 = vunpack.c.l.b16 %v808
    %v1488 = vunpack.c.h.b16 %v808
    %v1489 = vunpack.c.l.b16 %v809
    %v1490 = vunpack.c.h.b16 %v809
    %v1491 = vunpack.c.l.b16 %v810
    %v1492 = vunpack.c.h.b16 %v810
    %v1493 = vunpack.c.l.b16 %v811
    %v1494 = vunpack.c.h.b16 %v811
    %v1495 = vunpack.c.l.b16 %v812
    %v1496 = vunpack.c.h.b16 %v812
    %v1497 = vunpack.c.l.b16 %v813
    %v1498 = vunpack.c.h.b16 %v813
    %v1499 = vunpack.c.l.b16 %v814
    %v1500 = vunpack.c.h.b16 %v814
    %v1501 = vunpack.c.l.b16 %v815
    %v1502 = vunpack.c.h.b16 %v815
    %v1503 = vunpack.c.l.b16 %v816
    %v1504 = vunpack.c.h.b16 %v816
    %v1505 = vunpack.c.l.b16 %v817
    %v1506 = vunpack.c.h.b16 %v817
    %v1507 = vunpack.c.l.b16 %v818
    %v1508 = vunpack.c.h.b16 %v818
    %v1509 = vunpack.c.l.b16 %v819
    %v1510 = vunpack.c.h.b16 %v819
    %v1511 = vunpack.c.l.b16 %v820
    %v1512 = vunpack.c.h.b16 %v820
    %v1513 = vunpack.c.l.b16 %v821
    %v1514 = vunpack.c.h.b16 %v821
    %v1515 = vunpack.c.l.b16 %v822
    %v1516 = vunpack.c.h.b16 %v822
    %v1517 = vunpack.c.l.b16 %v823
    %v1518 = vunpack.c.h.b16 %v823
    %v1519 = vunpack.c.l.b16 %v824
    %v1520 = vunpack.c.h.b16 %v824
    %v1521 = vunpack.c.l.b16 %v825
    %v1522 = vunpack.c.h.b16 %v825
    %v1523 = vunpack.c.l.b16 %v826
    %v1524 = vunpack.c.h.b16 %v826
    %v1525 = vunpack.c.l.b16 %v827
    %v1526 = vunpack.c.h.b16 %v827
    %v1527 = vunpack.c.l.b16 %v828
    %v1528 = vunpack.c.h.b16 %v828
    %v1529 = vunpack.c.l.b16 %v829
    %v1530 = vunpack.c.h.b16 %v829
    %v1531 = vunpack.c.l.b16 %v830
    %v1532 = vunpack.c.h.b16 %v830
    %v1533 = vunpack.c.l.b16 %v831
    %v1534 = vunpack.c.h.b16 %v831
    %v1535 = vunpack.c.l.b16 %v832
    %v1536 = vunpack.c.h.b16 %v832
    %v1537 = vunpack.c.l.b16 %v833
    %v1538 = vunpack.c.h.b16 %v833
    %v1539 = vunpack.c.l.b16 %v834
    %v1540 = vunpack.c.h.b16 %v834
    %v1541 = vunpack.c.l.b16 %v835
    %v1542 = vunpack.c.h.b16 %v835
    %v1543 = vunpack.c.l.b16 %v836
    %v1544 = vunpack.c.h.b16 %v836
    %v1545 = vunpack.c.l.b16 %v837
    %v1546 = vunpack.c.h.b16 %v837
    %v1547 = vunpack.c.l.b16 %v838
    %v1548 = vunpack.c.h.b16 %v838
    %v1549 = vunpack.c.l.b16 %v839
    %v1550 = vunpack.c.h.b16 %v839
    %v1551 = vunpack.c.l.b16 %v840
    %v1552 = vunpack.c.h.b16 %v840
    %v1553 = vunpack.c.l.b16 %v841
    %v1554 = vunpack.c.h.b16 %v841
    %v1555 = vunpack.c.l.b16 %v842
    %v1556 = vunpack.c.h.b16 %v842
    %v1557 = vunpack.c.l.b16 %v843
    %v1558 = vunpack.c.h.b16 %v843
    %v1559 = vunpack.c.l.b16 %v844
    %v1560 = vunpack.c.h.b16 %v844
    %v1561 = vunpack.c.l.b16 %v845
    %v1562 = vunpack.c.h.b16 %v845
    %v1563 = vunpack.c.l.b16 %v846
    %v1564 = vunpack.c.h.b16 %v846
    %v1565 = vunpack.c.l.b16 %v847
    %v1566 = vunpack.c.h.b16 %v847
    %v1567 = vunpack.c.l.b16 %v848
    %v1568 = vunpack.c.h.b16 %v848
    %v1569 = vunpack.c.l.b16 %v849
    %v1570 = vunpack.c.h.b16 %v849
    %v1571 = vunpack.c.l.b16 %v850
    %v1572 = vunpack.c.h.b16 %v850
    %v1573 = vunpack.c.l.b16 %v851
    %v1574 = vunpack.c.h.b16 %v851
    %v1575 = vunpack.c.l.b16 %v852
    %v1576 = vunpack.c.h.b16 %v852
    %v1577 = vunpack.c.l.b16 %v853
    %v1578 = vunpack.c.h.b16 %v853
    %v1579 = vunpack.c.l.b16 %v854
    %v1580 = vunpack.c.h.b16 %v854
    %v1581 = vunpack.c.l.b16 %v855
    %v1582 = vunpack.c.h.b16 %v855
    %v1583 = vunpack.c.l.b16 %v856
    %v1584 = vunpack.c.h.b16 %v856
    %v1585 = vunpack.c.l.b16 %v857
    %v1586 = vunpack.c.h.b16 %v857
    %v1587 = vunpack.c.l.b16 %v858
    %v1588 = vunpack.c.h.b16 %v858
    %v1589 = vunpack.c.l.b16 %v859
    %v1590 = vunpack.c.h.b16 %v859
    %v1591 = vunpack.c.l.b16 %v860
    %v1592 = vunpack.c.h.b16 %v860
    %v1593 = vunpack.c.l.b16 %v861
    %v1594 = vunpack.c.h.b16 %v861
    %v1595 = vunpack.c.l.b16 %v862
    %v1596 = vunpack.c.h.b16 %v862
    %v1597 = vunpack.c.l.b16 %v863
    %v1598 = vunpack.c.h.b16 %v863
    %v1599 = vunpack.c.l.b16 %v864
    %v1600 = vunpack.c.h.b16 %v864
    %v1601 = vunpack.c.l.b16 %v865
    %v1602 = vunpack.c.h.b16 %v865
    %v1603 = vunpack.c.l.b16 %v866
    %v1604 = vunpack.c.h.b16 %v866
    %v1605 = vunpack.c.l.b16 %v867
    %v1606 = vunpack.c.h.b16 %v867
    %v1607 = vunpack.c.l.b16 %v868
    %v1608 = vunpack.c.h.b16 %v868
    %v1609 = vunpack.c.l.b16 %v869
    %v1610 = vunpack.c.h.b16 %v869
    %v1611 = vunpack.c.l.b16 %v870
    %v1612 = vunpack.c.h.b16 %v870
    %v1613 = vunpack.c.l.b16 %v871
    %v1614 = vunpack.c.h.b16 %v871
    %v1615 = vunpack.c.l.b16 %v872
    %v1616 = vunpack.c.h.b16 %v872
    %v1617 = vunpack.c.l.b16 %v873
    %v1618 = vunpack.c.h.b16 %v873
    %v1619 = vunpack.c.l.b16 %v874
    %v1620 = vunpack.c.h.b16 %v874
    %v1621 = vunpack.c.l.b16 %v875
    %v1622 = vunpack.c.h.b16 %v875
    %v1623 = vunpack.c.l.b16 %v876
    %v1624 = vunpack.c.h.b16 %v876
    %v1625 = vunpack.c.l.b16 %v877
    %v1626 = vunpack.c.h.b16 %v877
    %v1627 = vunpack.c.l.b16 %v878
    %v1628 = vunpack.c.h.b16 %v878
    %v1629 = vunpack.c.l.b16 %v879
    %v1630 = vunpack.c.h.b16 %v879
    %v1631 = vunpack.c.l.b16 %v880
    %v1632 = vunpack.c.h.b16 %v880
    %v1633 = vunpack.c.l.b16 %v881
    %v1634 = vunpack.c.h.b16 %v881
    %v1635 = vunpack.c.l.b16 %v882
    %v1636 = vunpack.c.h.b16 %v882
    %v1637 = vunpack.c.l.b16 %v883
    %v1638 = vunpack.c.h.b16 %v883
    %v1639 = vunpack.c.l.b16 %v884
    %v1640 = vunpack.c.h.b16 %v884
    %v1641 = vunpack.c.l.b16 %v885
    %v1642 = vunpack.c.h.b16 %v885
    %v1643 = vunpack.c.l.b16 %v886
    %v1644 = vunpack.c.h.b16 %v886
    %v1645 = vunpack.c.l.b16 %v887
    %v1646 = vunpack.c.h.b16 %v887
    %v1647 = vunpack.c.l.b16 %v888
    %v1648 = vunpack.c.h.b16 %v888
    %v1649 = vunpack.c.l.b16 %v889
    %v1650 = vunpack.c.h.b16 %v889
    %v1651 = vunpack.c.l.b16 %v890
    %v1652 = vunpack.c.h.b16 %v890
    %v1653 = vunpack.c.l.b16 %v891
    %v1654 = vunpack.c.h.b16 %v891
    %v1655 = vunpack.c.l.b16 %v892
    %v1656 = vunpack.c.h.b16 %v892
    %v1657 = vunpack.c.l.b16 %v893
    %v1658 = vunpack.c.h.b16 %v893
    %v1659 = vunpack.c.l.b16 %v894
    %v1660 = vunpack.c.h.b16 %v894
    %v1661 = vunpack.c.l.b16 %v895
    %v1662 = vunpack.c.h.b16 %v895
    %v1663 = vunpack.c.l.b16 %v896
    %v1664 = vunpack.c.h.b16 %v896
    %v1665 = vunpack.c.l.b16 %v897
    %v1666 = vunpack.c.h.b16 %v897
    %v1667 = vunpack.c.l.b16 %v898
    %v1668 = vunpack.c.h.b16 %v898
    %v1669 = vunpack.c.l.b16 %v899
    %v1670 = vunpack.c.h.b16 %v899
    %v1671 = vunpack.c.l.b16 %v900
    %v1672 = vunpack.c.h.b16 %v900
    %v1673 = vunpack.c.l.b16 %v901
    %v1674 = vunpack.c.h.b16 %v901
    %v1675 = vunpack.c.l.b16 %v902
    %v1676 = vunpack.c.h.b16 %v902
    %v1677 = vunpack.c.l.b16 %v903
    %v1678 = vunpack.c.h.b16 %v903
    %v1679 = vunpack.c.l.b16 %v904
    %v1680 = vunpack.c.h.b16 %v904
    %v1681 = vunpack.c.l.b16 %v905
    %v1682 = vunpack.c.h.b16 %v905
    %v1683 = vunpack.c.l.b16 %v906
    %v1684 = vunpack.c.h.b16 %v906
    %v1685 = vunpack.c.l.b16 %v907
    %v1686 = vunpack.c.h.b16 %v907
    %v1687 = vunpack.c.l.b16 %v908
    %v1688 = vunpack.c.h.b16 %v908
    %v1689 = vunpack.c.l.b16 %v909
    %v1690 = vunpack.c.h.b16 %v909
    %v1691 = vunpack.c.l.b16 %v910
    %v1692 = vunpack.c.h.b16 %v910
    %v1693 = vunpack.c.l.b16 %v911
    %v1694 = vunpack.c.h.b16 %v911
    %v1695 = vunpack.c.l.b16 %v912
    %v1696 = vunpack.c.h.b16 %v912
    %v1697 = vunpack.c.l.b16 %v913
    %v1698 = vunpack.c.h.b16 %v913
    %v1699 = vunpack.c.l.b16 %v914
    %v1700 = vunpack.c.h.b16 %v914
    %v1701 = vunpack.c.l.b16 %v915
    %v1702 = vunpack.c.h.b16 %v915
    %v1703 = vunpack.c.l.b16 %v916
    %v1704 = vunpack.c.h.b16 %v916
    %v1705 = vunpack.c.l.b16 %v917
    %v1706 = vunpack.c.h.b16 %v917
    %v1707 = vunpack.c.l.b16 %v918
    %v1708 = vunpack.c.h.b16 %v918
    %v1709 = vunpack.c.l.b16 %v919
    %v1710 = vunpack.c.h.b16 %v919
    %v1711 = vunpack.c.l.b16 %v920
    %v1712 = vunpack.c.h.b16 %v920
    %v1713 = vunpack.c.l.b16 %v921
    %v1714 = vunpack.c.h.b16 %v921
    %v1715 = vunpack.c.l.b16 %v922
    %v1716 = vunpack.c.h.b16 %v922
    %v1717 = vunpack.c.l.b16 %v923
    %v1718 = vunpack.c.h.b16 %v923
    %v1719 = vunpack.c.l.b16 %v924
    %v1720 = vunpack.c.h.b16 %v924
    %v1721 = vunpack.c.l.b16 %v925
    %v1722 = vunpack.c.h.b16 %v925
    %v1723 = vunpack.c.l.b16 %v926
    %v1724 = vunpack.c.h.b16 %v926
    %v1725 = vunpack.c.l.b16 %v927
    %v1726 = vunpack.c.h.b16 %v927
    %v1727 = vunpack.c.l.b16 %v928
    %v1728 = vunpack.c.h.b16 %v928
    %v1729 = vunpack.c.l.b16 %v929
    %v1730 = vunpack.c.h.b16 %v929
    %v1731 = vunpack.c.l.b16 %v930
    %v1732 = vunpack.c.h.b16 %v930
    %v1733 = vunpack.c.l.b16 %v931
    %v1734 = vunpack.c.h.b16 %v931
    %v1735 = vunpack.c.l.b16 %v932
    %v1736 = vunpack.c.h.b16 %v932
    %v1737 = vunpack.c.l.b16 %v933
    %v1738 = vunpack.c.h.b16 %v933
    %v1739 = vunpack.c.l.b16 %v934
    %v1740 = vunpack.c.h.b16 %v934
    %v1741 = vunpack.c.l.b16 %v935
    %v1742 = vunpack.c.h.b16 %v935
    %v1743 = vunpack.c.l.b16 %v936
    %v1744 = vunpack.c.h.b16 %v936
    %v1745 = vunpack.c.l.b16 %v937
    %v1746 = vunpack.c.h.b16 %v937
    %v1747 = vunpack.c.l.b16 %v938
    %v1748 = vunpack.c.h.b16 %v938
    %v1749 = vpack.c.b16 %v1245, %v1237
    %v1750 = vpack.c.b16 %v1246, %v1238
    %v1751 = vpack.c.b16 %v1247, %v1239
    %v1752 = vpack.c.b16 %v1248, %v1240
    %v1753 = vpack.c.b16 %v1249, %v1241
    %v1754 = vpack.c.b16 %v1250, %v1242
    %v1755 = vpack.c.b16 %v1251, %v1243
    %v1756 = vpack.c.b16 %v1252, %v1244
    %v1757 = vpack.c.b16 %v1261, %v1253
    %v1758 = vpack.c.b16 %v1262, %v1254
    %v1759 = vpack.c.b16 %v1263, %v1255
    %v1760 = vpack.c.b16 %v1264, %v1256
    %v1761 = vpack.c.b16 %v1265, %v1257
    %v1762 = vpack.c.b16 %v1266, %v1258
    %v1763 = vpack.c.b16 %v1267, %v1259
    %v1764 = vpack.c.b16 %v1268, %v1260
    %v1765 = vpack.c.b16 %v1277, %v1269
    %v1766 = vpack.c.b16 %v1278, %v1270
    %v1767 = vpack.c.b16 %v1279, %v1271
    %v1768 = vpack.c.b16 %v1280, %v1272
    %v1769 = vpack.c.b16 %v1281, %v1273
    %v1770 = vpack.c.b16 %v1282, %v1274
    %v1771 = vpack.c.b16 %v1283, %v1275
    %v1772 = vpack.c.b16 %v1284, %v1276
    %v1773 = vpack.c.b16 %v1293, %v1285
    %v1774 = vpack.c.b16 %v1294, %v1286
    %v1775 = vpack.c.b16 %v1295, %v1287
    %v1776 = vpack.c.b16 %v1296, %v1288
    %v1777 = vpack.c.b16 %v1297, %v1289
    %v1778 = vpack.c.b16 %v1298, %v1290
    %v1779 = vpack.c.b16 %v1299, %v1291
    %v1780 = vpack.c.b16 %v1300, %v1292
    %v1781 = vpack.c.b16 %v1309, %v1301
    %v1782 = vpack.c.b16 %v1310, %v1302
    %v1783 = vpack.c.b16 %v1311, %v1303
    %v1784 = vpack.c.b16 %v1312, %v1304
    %v1785 = vpack.c.b16 %v1313, %v1305
    %v1786 = vpack.c.b16 %v1314, %v1306
    %v1787 = vpack.c.b16 %v1315, %v1307
    %v1788 = vpack.c.b16 %v1316, %v1308
    %v1789 = vpack.c.b16 %v1325, %v1317
    %v1790 = vpack.c.b16 %v1326, %v1318
    %v1791 = vpack.c.b16 %v1327, %v1319
    %v1792 = vpack.c.b16 %v1328, %v1320
    %v1793 = vpack.c.b16 %v1329, %v1321
    %v1794 = vpack.c.b16 %v1330, %v1322
    %v1795 = vpack.c.b16 %v1331, %v1323
    %v1796 = vpack.c.b16 %v1332, %v1324
    %v1797 = vpack.c.b16 %v1341, %v1333
    %v1798 = vpack.c.b16 %v1342, %v1334
    %v1799 = vpack.c.b16 %v1343, %v1335
    %v1800 = vpack.c.b16 %v1344, %v1336
    %v1801 = vpack.c.b16 %v1345, %v1337
    %v1802 = vpack.c.b16 %v1346, %v1338
    %v1803 = vpack.c.b16 %v1347, %v1339
    %v1804 = vpack.c.b16 %v1348, %v1340
    %v1805 = vpack.c.b16 %v1357, %v1349
    %v1806 = vpack.c.b16 %v1358, %v1350
    %v1807 = vpack.c.b16 %v1359, %v1351
    %v1808 = vpack.c.b16 %v1360, %v1352
    %v1809 = vpack.c.b16 %v1361, %v1353
    %v1810 = vpack.c.b16 %v1362, %v1354
    %v1811 = vpack.c.b16 %v1363, %v1355
    %v1812 = vpack.c.b16 %v1364, %v1356
    %v1813 = vpack.c.b16 %v1373, %v1365
    %v1814 = vpack.c.b16 %v1374, %v1366
    %v1815 = vpack.c.b16 %v1375, %v1367
    %v1816 = vpack.c.b16 %v1376, %v1368
    %v1817 = vpack.c.b16 %v1377, %v1369
    %v1818 = vpack.c.b16 %v1378, %v1370
    %v1819 = vpack.c.b16 %v1379, %v1371
    %v1820 = vpack.c.b16 %v1380, %v1372
    %v1821 = vpack.c.b16 %v1389, %v1381
    %v1822 = vpack.c.b16 %v1390, %v1382
    %v1823 = vpack.c.b16 %v1391, %v1383
    %v1824 = vpack.c.b16 %v1392, %v1384
    %v1825 = vpack.c.b16 %v1393, %v1385
    %v1826 = vpack.c.b16 %v1394, %v1386
    %v1827 = vpack.c.b16 %v1395, %v1387
    %v1828 = vpack.c.b16 %v1396, %v1388
    %v1829 = vpack.c.b16 %v1405, %v1397
    %v1830 = vpack.c.b16 %v1406, %v1398
    %v1831 = vpack.c.b16 %v1407, %v1399
    %v1832 = vpack.c.b16 %v1408, %v1400
    %v1833 = vpack.c.b16 %v1409, %v1401
    %v1834 = vpack.c.b16 %v1410, %v1402
    %v1835 = vpack.c.b16 %v1411, %v1403
    %v1836 = vpack.c.b16 %v1412, %v1404
    %v1837 = vpack.c.b16 %v1421, %v1413
    %v1838 = vpack.c.b16 %v1422, %v1414
    %v1839 = vpack.c.b16 %v1423, %v1415
    %v1840 = vpack.c.b16 %v1424, %v1416
    %v1841 = vpack.c.b16 %v1425, %v1417
    %v1842 = vpack.c.b16 %v1426, %v1418
    %v1843 = vpack.c.b16 %v1427, %v1419
    %v1844 = vpack.c.b16 %v1428, %v1420
    %v1845 = vpack.c.b16 %v1437, %v1429
    %v1846 = vpack.c.b16 %v1438, %v1430
    %v1847 = vpack.c.b16 %v1439, %v1431
    %v1848 = vpack.c.b16 %v1440, %v1432
    %v1849 = vpack.c.b16 %v1441, %v1433
    %v1850 = vpack.c.b16 %v1442, %v1434
    %v1851 = vpack.c.b16 %v1443, %v1435
    %v1852 = vpack.c.b16 %v1444, %v1436
    %v1853 = vpack.c.b16 %v1453, %v1445
    %v1854 = vpack.c.b16 %v1454, %v1446
    %v1855 = vpack.c.b16 %v1455, %v1447
    %v1856 = vpack.c.b16 %v1456, %v1448
    %v1857 = vpack.c.b16 %v1457, %v1449
    %v1858 = vpack.c.b16 %v1458, %v1450
    %v1859 = vpack.c.b16 %v1459, %v1451
    %v1860 = vpack.c.b16 %v1460, %v1452
    %v1861 = vpack.c.b16 %v1469, %v1461
    %v1862 = vpack.c.b16 %v1470, %v1462
    %v1863 = vpack.c.b16 %v1471, %v1463
    %v1864 = vpack.c.b16 %v1472, %v1464
    %v1865 = vpack.c.b16 %v1473, %v1465
    %v1866 = vpack.c.b16 %v1474, %v1466
    %v1867 = vpack.c.b16 %v1475, %v1467
    %v1868 = vpack.c.b16 %v1476, %v1468
    %v1869 = vpack.c.b16 %v1485, %v1477
    %v1870 = vpack.c.b16 %v1486, %v1478
    %v1871 = vpack.c.b16 %v1487, %v1479
    %v1872 = vpack.c.b16 %v1488, %v1480
    %v1873 = vpack.c.b16 %v1489, %v1481
    %v1874 = vpack.c.b16 %v1490, %v1482
    %v1875 = vpack.c.b16 %v1491, %v1483
    %v1876 = vpack.c.b16 %v1492, %v1484
    %v1877 = vpack.c.b16 %v1501, %v1493
    %v1878 = vpack.c.b16 %v1502, %v1494
    %v1879 = vpack.c.b16 %v1503, %v1495
    %v1880 = vpack.c.b16 %v1504, %v1496
    %v1881 = vpack.c.b16 %v1505, %v1497
    %v1882 = vpack.c.b16 %v1506, %v1498
    %v1883 = vpack.c.b16 %v1507, %v1499
    %v1884 = vpack.c.b16 %v1508, %v1500
    %v1885 = vpack.c.b16 %v1517, %v1509
    %v1886 = vpack.c.b16 %v1518, %v1510
    %v1887 = vpack.c.b16 %v1519, %v1511
    %v1888 = vpack.c.b16 %v1520, %v1512
    %v1889 = vpack.c.b16 %v1521, %v1513
    %v1890 = vpack.c.b16 %v1522, %v1514
    %v1891 = vpack.c.b16 %v1523, %v1515
    %v1892 = vpack.c.b16 %v1524, %v1516
    %v1893 = vpack.c.b16 %v1533, %v1525
    %v1894 = vpack.c.b16 %v1534, %v1526
    %v1895 = vpack.c.b16 %v1535, %v1527
    %v1896 = vpack.c.b16 %v1536, %v1528
    %v1897 = vpack.c.b16 %v1537, %v1529
    %v1898 = vpack.c.b16 %v1538, %v1530
    %v1899 = vpack.c.b16 %v1539, %v1531
    %v1900 = vpack.c.b16 %v1540, %v1532
    %v1901 = vpack.c.b16 %v1549, %v1541
    %v1902 = vpack.c.b16 %v1550, %v1542
    %v1903 = vpack.c.b16 %v1551, %v1543
    %v1904 = vpack.c.b16 %v1552, %v1544
    %v1905 = vpack.c.b16 %v1553, %v1545
    %v1906 = vpack.c.b16 %v1554, %v1546
    %v1907 = vpack.c.b16 %v1555, %v1547
    %v1908 = vpack.c.b16 %v1556, %v1548
    %v1909 = vpack.c.b16 %v1565, %v1557
    %v1910 = vpack.c.b16 %v1566, %v1558
    %v1911 = vpack.c.b16 %v1567, %v1559
    %v1912 = vpack.c.b16 %v1568, %v1560
    %v1913 = vpack.c.b16 %v1569, %v1561
    %v1914 = vpack.c.b16 %v1570, %v1562
    %v1915 = vpack.c.b16 %v1571, %v1563
    %v1916 = vpack.c.b16 %v1572, %v1564
    %v1917 = vpack.c.b16 %v1581, %v1573
    %v1918 = vpack.c.b16 %v1582, %v1574
    %v1919 = vpack.c.b16 %v1583, %v1575
    %v1920 = vpack.c.b16 %v1584, %v1576
    %v1921 = vpack.c.b16 %v1585, %v1577
    %v1922 = vpack.c.b16 %v1586, %v1578
    %v1923 = vpack.c.b16 %v1587, %v1579
    %v1924 = vpack.c.b16 %v1588, %v1580
    %v1925 = vpack.c.b16 %v1597, %v1589
    %v1926 = vpack.c.b16 %v1598, %v1590
    %v1927 = vpack.c.b16 %v1599, %v1591
    %v1928 = vpack.c.b16 %v1600, %v1592
    %v1929 = vpack.c.b16 %v1601, %v1593
    %v1930 = vpack.c.b16 %v1602, %v1594
    %v1931 = vpack.c.b16 %v1603, %v1595
    %v1932 = vpack.c.b16 %v1604, %v1596
    %v1933 = vpack.c.b16 %v1613, %v1605
    %v1934 = vpack.c.b16 %v1614, %v1606
    %v1935 = vpack.c.b16 %v1615, %v1607
    %v1936 = vpack.c.b16 %v1616, %v1608
    %v1937 = vpack.c.b16 %v1617, %v1609
    %v1938 = vpack.c.b16 %v1618, %v1610
    %v1939 = vpack.c.b16 %v1619, %v1611
    %v1940 = vpack.c.b16 %v1620, %v1612
    %v1941 = vpack.c.b16 %v1629, %v1621
    %v1942 = vpack.c.b16 %v1630, %v1622
    %v1943 = vpack.c.b16 %v1631, %v1623
    %v1944 = vpack.c.b16 %v1632, %v1624
    %v1945 = vpack.c.b16 %v1633, %v1625
    %v1946 = vpack.c.b16 %v1634, %v1626
    %v1947 = vpack.c.b16 %v1635, %v1627
    %v1948 = vpack.c.b16 %v1636, %v1628
    %v1949 = vpack.c.b16 %v1645, %v1637
    %v1950 = vpack.c.b16 %v1646, %v1638
    %v1951 = vpack.c.b16 %v1647, %v1639
    %v1952 = vpack.c.b16 %v1648, %v1640
    %v1953 = vpack.c.b16 %v1649, %v1641
    %v1954 = vpack.c.b16 %v1650, %v1642
    %v1955 = vpack.c.b16 %v1651, %v1643
    %v1956 = vpack.c.b16 %v1652, %v1644
    %v1957 = vpack.c.b16 %v1661, %v1653
    %v1958 = vpack.c.b16 %v1662, %v1654
    %v1959 = vpack.c.b16 %v1663, %v1655
    %v1960 = vpack.c.b16 %v1664, %v1656
    %v1961 = vpack.c.b16 %v1665, %v1657
    %v1962 = vpack.c.b16 %v1666, %v1658
    %v1963 = vpack.c.b16 %v1667, %v1659
    %v1964 = vpack.c.b16 %v1668, %v1660
    %v1965 = vpack.c.b16 %v1677, %v1669
    %v1966 = vpack.c.b16 %v1678, %v1670
    %v1967 = vpack.c.b16 %v1679, %v1671
    %v1968 = vpack.c.b16 %v1680, %v1672
    %v1969 = vpack.c.b16 %v1681, %v1673
    %v1970 = vpack.c.b16 %v1682, %v1674
    %v1971 = vpack.c.b16 %v1683, %v1675
    %v1972 = vpack.c.b16 %v1684, %v1676
    %v1973 = vpack.c.b16 %v1693, %v1685
    %v1974 = vpack.c.b16 %v1694, %v1686
    %v1975 = vpack.c.b16 %v1695, %v1687
    %v1976 = vpack.c.b16 %v1696, %v1688
    %v1977 = vpack.c.b16 %v1697, %v1689
    %v1978 = vpack.c.b16 %v1698, %v1690
    %v1979 = vpack.c.b16 %v1699, %v1691
    %v1980 = vpack.c.b16 %v1700, %v1692
    %v1981 = vpack.c.b16 %v1709, %v1701
    %v1982 = vpack.c.b16 %v1710, %v1702
    %v1983 = vpack.c.b16 %v1711, %v1703
    %v1984 = vpack.c.b16 %v1712, %v1704
    %v1985 = vpack.c.b16 %v1713, %v1705
    %v1986 = vpack.c.b16 %v1714, %v1706
    %v1987 = vpack.c.b16 %v1715, %v1707
    %v1988 = vpack.c.b16 %v1716, %v1708
    %v1989 = vpack.c.b16 %v1725, %v1717
    %v1990 = vpack.c.b16 %v1726, %v1718
    %v1991 = vpack.c.b16 %v1727, %v1719
    %v1992 = vpack.c.b16 %v1728, %v1720
    %v1993 = vpack.c.b16 %v1729, %v1721
    %v1994 = vpack.c.b16 %v1730, %v1722
    %v1995 = vpack.c.b16 %v1731, %v1723
    %v1996 = vpack.c.b16 %v1732, %v1724
    %v1997 = vpack.c.b16 %v1741, %v1733
    %v1998 = vpack.c.b16 %v1742, %v1734
    %v1999 = vpack.c.b16 %v1743, %v1735
    %v2000 = vpack.c.b16 %v1744, %v1736
    %v2001 = vpack.c.b16 %v1745, %v1737
    %v2002 = vpack.c.b16 %v1746, %v1738
    %v2003 = vpack.c.b16 %v1747, %v1739
    %v2004 = vpack.c.b16 %v1748, %v1740
    %2261 = vmatprep.subr.bf16.mxu0 %v1806
    %2262 = vmatpush1.bf16.msra.mxu0 %v1805
    %2263 = vmatprep.subr.bf16.mxu0 %v1798
    %2264 = vmatpush1.bf16.msra.mxu0 %v1797
    %2265 = vmatprep.subr.bf16.mxu0 %v1790
    %2266 = vmatpush1.bf16.msra.mxu0 %v1789
    %2267 = vmatprep.subr.bf16.mxu0 %v1782
    %2268 = vmatpush1.bf16.msra.mxu0 %v1781
    %2269 = vmatprep.subr.bf16.mxu0 %v1774
    %2270 = vmatpush1.bf16.msra.mxu0 %v1773
    %2271 = vmatprep.subr.bf16.mxu0 %v1766
    %2272 = vmatpush1.bf16.msra.mxu0 %v1765
    %2273 = vmatprep.subr.bf16.mxu0 %v1758
    %2274 = vmatpush1.bf16.msra.mxu0 %v1757
    %2275 = vmatprep.subr.bf16.mxu0 %v1750
    %2276 = vmatpush1.bf16.msra.mxu0 %v1749
    %2277 = vmatprep.subr.bf16.mxu0 %v1870
    %2278 = vmatpush2.bf16.msra.mxu0 %v1869
    %2279 = vmatprep.subr.bf16.mxu0 %v1862
    %2280 = vmatpush2.bf16.msra.mxu0 %v1861
    %2281 = vmatprep.subr.bf16.mxu0 %v1854
    %2282 = vmatpush2.bf16.msra.mxu0 %v1853
    %2283 = vmatprep.subr.bf16.mxu0 %v1846
    %2284 = vmatpush2.bf16.msra.mxu0 %v1845
    %2285 = vmatprep.subr.bf16.mxu0 %v1838
    %2286 = vmatpush2.bf16.msra.mxu0 %v1837
    %2287 = vmatprep.subr.bf16.mxu0 %v1830
    %2288 = vmatpush2.bf16.msra.mxu0 %v1829
    %2289 = vmatprep.subr.bf16.mxu0 %v1822
    %2290 = vmatpush2.bf16.msra.mxu0 %v1821
    %2291 = vmatprep.subr.bf16.mxu0 %v1814
    %2292 = vmatpush2.bf16.msra.mxu0 %v1813
    %2293 = vmatprep.mubr.bf16.mxu0 %v680
    %2294 = vmatmul.mubr.bf16.gmra.mxu0 %v679
    %v2295 = vpop.f32.mrf.mxu0
    %v2296 = vadd.f32 %v944, %v2295
    %v2297 = vpop.f32.mrf.mxu0
    %v2298 = vadd.f32 %v948, %v2297
    %v2299 = vpop.f32.mrf.mxu0
    %v2300 = vpop.f32.mrf.mxu0
    %2301 = vdwg.mxu0
    %2302 = vmatprep.subr.bf16.mxu0 %v1934
    %2303 = vmatpush1.bf16.msra.mxu0 %v1933
    %2304 = vmatprep.subr.bf16.mxu0 %v1926
    %2305 = vmatpush1.bf16.msra.mxu0 %v1925
    %2306 = vmatprep.subr.bf16.mxu0 %v1918
    %2307 = vmatpush1.bf16.msra.mxu0 %v1917
    %2308 = vmatprep.subr.bf16.mxu0 %v1910
    %2309 = vmatpush1.bf16.msra.mxu0 %v1909
    %2310 = vmatprep.subr.bf16.mxu0 %v1902
    %2311 = vmatpush1.bf16.msra.mxu0 %v1901
    %2312 = vmatprep.subr.bf16.mxu0 %v1894
    %2313 = vmatpush1.bf16.msra.mxu0 %v1893
    %2314 = vmatprep.subr.bf16.mxu0 %v1886
    %2315 = vmatpush1.bf16.msra.mxu0 %v1885
    %2316 = vmatprep.subr.bf16.mxu0 %v1878
    %2317 = vmatpush1.bf16.msra.mxu0 %v1877
    %2318 = vmatprep.subr.bf16.mxu0 %v1998
    %2319 = vmatpush2.bf16.msra.mxu0 %v1997
    %2320 = vmatprep.subr.bf16.mxu0 %v1990
    %2321 = vmatpush2.bf16.msra.mxu0 %v1989
    %2322 = vmatprep.subr.bf16.mxu0 %v1982
    %2323 = vmatpush2.bf16.msra.mxu0 %v1981
    %2324 = vmatprep.subr.bf16.mxu0 %v1974
    %2325 = vmatpush2.bf16.msra.mxu0 %v1973
    %2326 = vmatprep.subr.bf16.mxu0 %v1966
    %2327 = vmatpush2.bf16.msra.mxu0 %v1965
    %2328 = vmatprep.subr.bf16.mxu0 %v1958
    %2329 = vmatpush2.bf16.msra.mxu0 %v1957
    %2330 = vmatprep.subr.bf16.mxu0 %v1950
    %2331 = vmatpush2.bf16.msra.mxu0 %v1949
    %2332 = vmatprep.subr.bf16.mxu0 %v1942
    %2333 = vmatpush2.bf16.msra.mxu0 %v1941
    %2334 = vmatprep.mubr.bf16.mxu0 %v682
    %2335 = vmatmul.mubr.bf16.gmra.mxu0 %v681
    %v2336 = vpop.f32.mrf.mxu0
    %v2337 = vadd.f32 %v2296, %v2336
    %v2338 = vpop.f32.mrf.mxu0
    %v2339 = vadd.f32 %v2298, %v2338
    %v2340 = vpop.f32.mrf.mxu0
    %v2341 = vpop.f32.mrf.mxu0
    %2342 = vdwg.mxu0
    %2343 = vmatprep.subr.bf16.mxu0 %v1808
    %2344 = vmatpush1.bf16.msra.mxu0 %v1807
    %2345 = vmatprep.subr.bf16.mxu0 %v1800
    %2346 = vmatpush1.bf16.msra.mxu0 %v1799
    %2347 = vmatprep.subr.bf16.mxu0 %v1792
    %2348 = vmatpush1.bf16.msra.mxu0 %v1791
    %2349 = vmatprep.subr.bf16.mxu0 %v1784
    %2350 = vmatpush1.bf16.msra.mxu0 %v1783
    %2351 = vmatprep.subr.bf16.mxu0 %v1776
    %2352 = vmatpush1.bf16.msra.mxu0 %v1775
    %2353 = vmatprep.subr.bf16.mxu0 %v1768
    %2354 = vmatpush1.bf16.msra.mxu0 %v1767
    %2355 = vmatprep.subr.bf16.mxu0 %v1760
    %2356 = vmatpush1.bf16.msra.mxu0 %v1759
    %2357 = vmatprep.subr.bf16.mxu0 %v1752
    %2358 = vmatpush1.bf16.msra.mxu0 %v1751
    %2359 = vmatprep.subr.bf16.mxu0 %v1872
    %2360 = vmatpush2.bf16.msra.mxu0 %v1871
    %2361 = vmatprep.subr.bf16.mxu0 %v1864
    %2362 = vmatpush2.bf16.msra.mxu0 %v1863
    %2363 = vmatprep.subr.bf16.mxu0 %v1856
    %2364 = vmatpush2.bf16.msra.mxu0 %v1855
    %2365 = vmatprep.subr.bf16.mxu0 %v1848
    %2366 = vmatpush2.bf16.msra.mxu0 %v1847
    %2367 = vmatprep.subr.bf16.mxu0 %v1840
    %2368 = vmatpush2.bf16.msra.mxu0 %v1839
    %2369 = vmatprep.subr.bf16.mxu0 %v1832
    %2370 = vmatpush2.bf16.msra.mxu0 %v1831
    %2371 = vmatprep.subr.bf16.mxu0 %v1824
    %2372 = vmatpush2.bf16.msra.mxu0 %v1823
    %2373 = vmatprep.subr.bf16.mxu0 %v1816
    %2374 = vmatpush2.bf16.msra.mxu0 %v1815
    %2375 = vmatprep.mubr.bf16.mxu0 %v680
    %2376 = vmatmul.mubr.bf16.gmra.mxu0 %v679
    %v2377 = vpop.f32.mrf.mxu0
    %v2378 = vadd.f32 %v952, %v2377
    %v2379 = vpop.f32.mrf.mxu0
    %v2380 = vadd.f32 %v956, %v2379
    %v2381 = vpop.f32.mrf.mxu0
    %v2382 = vpop.f32.mrf.mxu0
    %2383 = vdwg.mxu0
    %2384 = vmatprep.subr.bf16.mxu0 %v1936
    %2385 = vmatpush1.bf16.msra.mxu0 %v1935
    %2386 = vmatprep.subr.bf16.mxu0 %v1928
    %2387 = vmatpush1.bf16.msra.mxu0 %v1927
    %2388 = vmatprep.subr.bf16.mxu0 %v1920
    %2389 = vmatpush1.bf16.msra.mxu0 %v1919
    %2390 = vmatprep.subr.bf16.mxu0 %v1912
    %2391 = vmatpush1.bf16.msra.mxu0 %v1911
    %2392 = vmatprep.subr.bf16.mxu0 %v1904
    %2393 = vmatpush1.bf16.msra.mxu0 %v1903
    %2394 = vmatprep.subr.bf16.mxu0 %v1896
    %2395 = vmatpush1.bf16.msra.mxu0 %v1895
    %2396 = vmatprep.subr.bf16.mxu0 %v1888
    %2397 = vmatpush1.bf16.msra.mxu0 %v1887
    %2398 = vmatprep.subr.bf16.mxu0 %v1880
    %2399 = vmatpush1.bf16.msra.mxu0 %v1879
    %2400 = vmatprep.subr.bf16.mxu0 %v2000
    %2401 = vmatpush2.bf16.msra.mxu0 %v1999
    %2402 = vmatprep.subr.bf16.mxu0 %v1992
    %2403 = vmatpush2.bf16.msra.mxu0 %v1991
    %2404 = vmatprep.subr.bf16.mxu0 %v1984
    %2405 = vmatpush2.bf16.msra.mxu0 %v1983
    %2406 = vmatprep.subr.bf16.mxu0 %v1976
    %2407 = vmatpush2.bf16.msra.mxu0 %v1975
    %2408 = vmatprep.subr.bf16.mxu0 %v1968
    %2409 = vmatpush2.bf16.msra.mxu0 %v1967
    %2410 = vmatprep.subr.bf16.mxu0 %v1960
    %2411 = vmatpush2.bf16.msra.mxu0 %v1959
    %2412 = vmatprep.subr.bf16.mxu0 %v1952
    %2413 = vmatpush2.bf16.msra.mxu0 %v1951
    %2414 = vmatprep.subr.bf16.mxu0 %v1944
    %2415 = vmatpush2.bf16.msra.mxu0 %v1943
    %2416 = vmatprep.mubr.bf16.mxu0 %v682
    %2417 = vmatmul.mubr.bf16.gmra.mxu0 %v681
    %v2418 = vpop.f32.mrf.mxu0
    %v2419 = vadd.f32 %v2378, %v2418
    %v2420 = vpop.f32.mrf.mxu0
    %v2421 = vadd.f32 %v2380, %v2420
    %v2422 = vpop.f32.mrf.mxu0
    %v2423 = vpop.f32.mrf.mxu0
    %2424 = vdwg.mxu0
    %2425 = vmatprep.subr.bf16.mxu0 %v1810
    %2426 = vmatpush1.bf16.msra.mxu0 %v1809
    %2427 = vmatprep.subr.bf16.mxu0 %v1802
    %2428 = vmatpush1.bf16.msra.mxu0 %v1801
    %2429 = vmatprep.subr.bf16.mxu0 %v1794
    %2430 = vmatpush1.bf16.msra.mxu0 %v1793
    %2431 = vmatprep.subr.bf16.mxu0 %v1786
    %2432 = vmatpush1.bf16.msra.mxu0 %v1785
    %2433 = vmatprep.subr.bf16.mxu0 %v1778
    %2434 = vmatpush1.bf16.msra.mxu0 %v1777
    %2435 = vmatprep.subr.bf16.mxu0 %v1770
    %2436 = vmatpush1.bf16.msra.mxu0 %v1769
    %2437 = vmatprep.subr.bf16.mxu0 %v1762
    %2438 = vmatpush1.bf16.msra.mxu0 %v1761
    %2439 = vmatprep.subr.bf16.mxu0 %v1754
    %2440 = vmatpush1.bf16.msra.mxu0 %v1753
    %2441 = vmatprep.subr.bf16.mxu0 %v1874
    %2442 = vmatpush2.bf16.msra.mxu0 %v1873
    %2443 = vmatprep.subr.bf16.mxu0 %v1866
    %2444 = vmatpush2.bf16.msra.mxu0 %v1865
    %2445 = vmatprep.subr.bf16.mxu0 %v1858
    %2446 = vmatpush2.bf16.msra.mxu0 %v1857
    %2447 = vmatprep.subr.bf16.mxu0 %v1850
    %2448 = vmatpush2.bf16.msra.mxu0 %v1849
    %2449 = vmatprep.subr.bf16.mxu0 %v1842
    %2450 = vmatpush2.bf16.msra.mxu0 %v1841
    %2451 = vmatprep.subr.bf16.mxu0 %v1834
    %2452 = vmatpush2.bf16.msra.mxu0 %v1833
    %2453 = vmatprep.subr.bf16.mxu0 %v1826
    %2454 = vmatpush2.bf16.msra.mxu0 %v1825
    %2455 = vmatprep.subr.bf16.mxu0 %v1818
    %2456 = vmatpush2.bf16.msra.mxu0 %v1817
    %2457 = vmatprep.mubr.bf16.mxu0 %v680
    %2458 = vmatmul.mubr.bf16.gmra.mxu0 %v679
    %v2459 = vpop.f32.mrf.mxu0
    %v2460 = vadd.f32 %v960, %v2459
    %v2461 = vpop.f32.mrf.mxu0
    %v2462 = vadd.f32 %v964, %v2461
    %v2463 = vpop.f32.mrf.mxu0
    %v2464 = vpop.f32.mrf.mxu0
    %2465 = vdwg.mxu0
    %2466 = vmatprep.subr.bf16.mxu0 %v1938
    %2467 = vmatpush1.bf16.msra.mxu0 %v1937
    %2468 = vmatprep.subr.bf16.mxu0 %v1930
    %2469 = vmatpush1.bf16.msra.mxu0 %v1929
    %2470 = vmatprep.subr.bf16.mxu0 %v1922
    %2471 = vmatpush1.bf16.msra.mxu0 %v1921
    %2472 = vmatprep.subr.bf16.mxu0 %v1914
    %2473 = vmatpush1.bf16.msra.mxu0 %v1913
    %2474 = vmatprep.subr.bf16.mxu0 %v1906
    %2475 = vmatpush1.bf16.msra.mxu0 %v1905
    %2476 = vmatprep.subr.bf16.mxu0 %v1898
    %2477 = vmatpush1.bf16.msra.mxu0 %v1897
    %2478 = vmatprep.subr.bf16.mxu0 %v1890
    %2479 = vmatpush1.bf16.msra.mxu0 %v1889
    %2480 = vmatprep.subr.bf16.mxu0 %v1882
    %2481 = vmatpush1.bf16.msra.mxu0 %v1881
    %2482 = vmatprep.subr.bf16.mxu0 %v2002
    %2483 = vmatpush2.bf16.msra.mxu0 %v2001
    %2484 = vmatprep.subr.bf16.mxu0 %v1994
    %2485 = vmatpush2.bf16.msra.mxu0 %v1993
    %2486 = vmatprep.subr.bf16.mxu0 %v1986
    %2487 = vmatpush2.bf16.msra.mxu0 %v1985
    %2488 = vmatprep.subr.bf16.mxu0 %v1978
    %2489 = vmatpush2.bf16.msra.mxu0 %v1977
    %2490 = vmatprep.subr.bf16.mxu0 %v1970
    %2491 = vmatpush2.bf16.msra.mxu0 %v1969
    %2492 = vmatprep.subr.bf16.mxu0 %v1962
    %2493 = vmatpush2.bf16.msra.mxu0 %v1961
    %2494 = vmatprep.subr.bf16.mxu0 %v1954
    %2495 = vmatpush2.bf16.msra.mxu0 %v1953
    %2496 = vmatprep.subr.bf16.mxu0 %v1946
    %2497 = vmatpush2.bf16.msra.mxu0 %v1945
    %2498 = vmatprep.mubr.bf16.mxu0 %v682
    %2499 = vmatmul.mubr.bf16.gmra.mxu0 %v681
    %v2500 = vpop.f32.mrf.mxu0
    %v2501 = vadd.f32 %v2460, %v2500
    %v2502 = vpop.f32.mrf.mxu0
    %v2503 = vadd.f32 %v2462, %v2502
    %v2504 = vpop.f32.mrf.mxu0
    %v2505 = vpop.f32.mrf.mxu0
    %2506 = vdwg.mxu0
    %2507 = vmatprep.subr.bf16.mxu0 %v1812
    %2508 = vmatpush1.bf16.msra.mxu0 %v1811
    %2509 = vmatprep.subr.bf16.mxu0 %v1804
    %2510 = vmatpush1.bf16.msra.mxu0 %v1803
    %2511 = vmatprep.subr.bf16.mxu0 %v1796
    %2512 = vmatpush1.bf16.msra.mxu0 %v1795
    %2513 = vmatprep.subr.bf16.mxu0 %v1788
    %2514 = vmatpush1.bf16.msra.mxu0 %v1787
    %2515 = vmatprep.subr.bf16.mxu0 %v1780
    %2516 = vmatpush1.bf16.msra.mxu0 %v1779
    %2517 = vmatprep.subr.bf16.mxu0 %v1772
    %2518 = vmatpush1.bf16.msra.mxu0 %v1771
    %2519 = vmatprep.subr.bf16.mxu0 %v1764
    %2520 = vmatpush1.bf16.msra.mxu0 %v1763
    %2521 = vmatprep.subr.bf16.mxu0 %v1756
    %2522 = vmatpush1.bf16.msra.mxu0 %v1755
    %2523 = vmatprep.subr.bf16.mxu0 %v1876
    %2524 = vmatpush2.bf16.msra.mxu0 %v1875
    %2525 = vmatprep.subr.bf16.mxu0 %v1868
    %2526 = vmatpush2.bf16.msra.mxu0 %v1867
    %2527 = vmatprep.subr.bf16.mxu0 %v1860
    %2528 = vmatpush2.bf16.msra.mxu0 %v1859
    %2529 = vmatprep.subr.bf16.mxu0 %v1852
    %2530 = vmatpush2.bf16.msra.mxu0 %v1851
    %2531 = vmatprep.subr.bf16.mxu0 %v1844
    %2532 = vmatpush2.bf16.msra.mxu0 %v1843
    %2533 = vmatprep.subr.bf16.mxu0 %v1836
    %2534 = vmatpush2.bf16.msra.mxu0 %v1835
    %2535 = vmatprep.subr.bf16.mxu0 %v1828
    %2536 = vmatpush2.bf16.msra.mxu0 %v1827
    %2537 = vmatprep.subr.bf16.mxu0 %v1820
    %2538 = vmatpush2.bf16.msra.mxu0 %v1819
    %2539 = vmatprep.mubr.bf16.mxu0 %v680
    %2540 = vmatmul.mubr.bf16.gmra.mxu0 %v679
    %v2541 = vpop.f32.mrf.mxu0
    %v2542 = vadd.f32 %v968, %v2541
    %v2543 = vpop.f32.mrf.mxu0
    %v2544 = vadd.f32 %v972, %v2543
    %v2545 = vpop.f32.mrf.mxu0
    %v2546 = vpop.f32.mrf.mxu0
    %2547 = vdwg.mxu0
    %2548 = vmatprep.subr.bf16.mxu0 %v1940
    %2549 = vmatpush1.bf16.msra.mxu0 %v1939
    %2550 = vmatprep.subr.bf16.mxu0 %v1932
    %2551 = vmatpush1.bf16.msra.mxu0 %v1931
    %2552 = vmatprep.subr.bf16.mxu0 %v1924
    %2553 = vmatpush1.bf16.msra.mxu0 %v1923
    %2554 = vmatprep.subr.bf16.mxu0 %v1916
    %2555 = vmatpush1.bf16.msra.mxu0 %v1915
    %2556 = vmatprep.subr.bf16.mxu0 %v1908
    %2557 = vmatpush1.bf16.msra.mxu0 %v1907
    %2558 = vmatprep.subr.bf16.mxu0 %v1900
    %2559 = vmatpush1.bf16.msra.mxu0 %v1899
    %2560 = vmatprep.subr.bf16.mxu0 %v1892
    %2561 = vmatpush1.bf16.msra.mxu0 %v1891
    %2562 = vmatprep.subr.bf16.mxu0 %v1884
    %2563 = vmatpush1.bf16.msra.mxu0 %v1883
    %2564 = vmatprep.subr.bf16.mxu0 %v2004
    %2565 = vmatpush2.bf16.msra.mxu0 %v2003
    %2566 = vmatprep.subr.bf16.mxu0 %v1996
    %2567 = vmatpush2.bf16.msra.mxu0 %v1995
    %2568 = vmatprep.subr.bf16.mxu0 %v1988
    %2569 = vmatpush2.bf16.msra.mxu0 %v1987
    %2570 = vmatprep.subr.bf16.mxu0 %v1980
    %2571 = vmatpush2.bf16.msra.mxu0 %v1979
    %2572 = vmatprep.subr.bf16.mxu0 %v1972
    %2573 = vmatpush2.bf16.msra.mxu0 %v1971
    %2574 = vmatprep.subr.bf16.mxu0 %v1964
    %2575 = vmatpush2.bf16.msra.mxu0 %v1963
    %2576 = vmatprep.subr.bf16.mxu0 %v1956
    %2577 = vmatpush2.bf16.msra.mxu0 %v1955
    %2578 = vmatprep.subr.bf16.mxu0 %v1948
    %2579 = vmatpush2.bf16.msra.mxu0 %v1947
    %2580 = vmatprep.mubr.bf16.mxu0 %v682
    %2581 = vmatmul.mubr.bf16.gmra.mxu0 %v681
    %v2582 = vpop.f32.mrf.mxu0
    %v2583 = vadd.f32 %v2542, %v2582
    %v2584 = vpop.f32.mrf.mxu0
    %v2585 = vadd.f32 %v2544, %v2584
    %v2586 = vpop.f32.mrf.mxu0
    %v2587 = vpop.f32.mrf.mxu0
    %2588 = vdwg.mxu0
    %v2589 = vmax.f32 %v2337, 0.0
    %v2590 = vmax.f32 %v2339, 0.0
    %v2591 = vmax.f32 %v2419, 0.0
    %v2592 = vmax.f32 %v2421, 0.0
    %v2593 = vmax.f32 %v2501, 0.0
    %v2594 = vmax.f32 %v2503, 0.0
    %v2595 = vmax.f32 %v2583, 0.0
    %v2596 = vmax.f32 %v2585, 0.0
    %v2597 = vpack.c.bf16 %v2589, %v2589
    %v2598 = vpack.c.bf16 %v2590, %v2590
    %v2599 = vpack.c.bf16 %v2591, %v2591
    %v2600 = vpack.c.bf16 %v2592, %v2592
    %v2601 = vpack.c.bf16 %v2593, %v2593
    %v2602 = vpack.c.bf16 %v2594, %v2594
    %v2603 = vpack.c.bf16 %v2595, %v2595
    %v2604 = vpack.c.bf16 %v2596, %v2596
    %v2605 = vld [vmem:[#allocation11] sm:$0xff]
    %v2606 = vld [vmem:[#allocation11 + $0x8] sm:$0xff]
    %v2607 = vld [vmem:[#allocation11 + $0x10] sm:$0xff]
    %v2608 = vld [vmem:[#allocation11 + $0x18] sm:$0xff]
    %v2609 = vld [vmem:[#allocation11 + $0x20] sm:$0xff]
    %v2610 = vld [vmem:[#allocation11 + $0x28] sm:$0xff]
    %v2611 = vld [vmem:[#allocation11 + $0x30] sm:$0xff]
    %v2612 = vld [vmem:[#allocation11 + $0x38] sm:$0xff]
    %v2613 = vld [vmem:[#allocation11 + $0x40] sm:$0xff]
    %v2614 = vld [vmem:[#allocation11 + $0x48] sm:$0xff]
    %v2615 = vld [vmem:[#allocation11 + $0x50] sm:$0xff]
    %v2616 = vld [vmem:[#allocation11 + $0x58] sm:$0xff]
    %v2617 = vld [vmem:[#allocation11 + $0x60] sm:$0xff]
    %v2618 = vld [vmem:[#allocation11 + $0x68] sm:$0xff]
    %v2619 = vld [vmem:[#allocation11 + $0x70] sm:$0xff]
    %v2620 = vld [vmem:[#allocation11 + $0x78] sm:$0xff]
    %v2621 = vld [vmem:[#allocation11 + $0x80] sm:$0xff]
    %v2622 = vld [vmem:[#allocation11 + $0x88] sm:$0xff]
    %v2623 = vld [vmem:[#allocation11 + $0x90] sm:$0xff]
    %v2624 = vld [vmem:[#allocation11 + $0x98] sm:$0xff]
    %v2625 = vld [vmem:[#allocation11 + $0xa0] sm:$0xff]
    %v2626 = vld [vmem:[#allocation11 + $0xa8] sm:$0xff]
    %v2627 = vld [vmem:[#allocation11 + $0xb0] sm:$0xff]
    %v2628 = vld [vmem:[#allocation11 + $0xb8] sm:$0xff]
    %v2629 = vld [vmem:[#allocation11 + $0xc0] sm:$0xff]
    %v2630 = vld [vmem:[#allocation11 + $0xc8] sm:$0xff]
    %v2631 = vld [vmem:[#allocation11 + $0xd0] sm:$0xff]
    %v2632 = vld [vmem:[#allocation11 + $0xd8] sm:$0xff]
    %v2633 = vld [vmem:[#allocation11 + $0xe0] sm:$0xff]
    %v2634 = vld [vmem:[#allocation11 + $0xe8] sm:$0xff]
    %v2635 = vld [vmem:[#allocation11 + $0xf0] sm:$0xff]
    %v2636 = vld [vmem:[#allocation11 + $0xf8] sm:$0xff]
    %v2637 = vld [vmem:[#allocation11 + $0x100] sm:$0xff]
    %v2638 = vld [vmem:[#allocation11 + $0x108] sm:$0xff]
    %v2639 = vld [vmem:[#allocation11 + $0x110] sm:$0xff]
    %v2640 = vld [vmem:[#allocation11 + $0x118] sm:$0xff]
    %v2641 = vld [vmem:[#allocation11 + $0x120] sm:$0xff]
    %v2642 = vld [vmem:[#allocation11 + $0x128] sm:$0xff]
    %v2643 = vld [vmem:[#allocation11 + $0x130] sm:$0xff]
    %v2644 = vld [vmem:[#allocation11 + $0x138] sm:$0xff]
    %v2645 = vld [vmem:[#allocation11 + $0x140] sm:$0xff]
    %v2646 = vld [vmem:[#allocation11 + $0x148] sm:$0xff]
    %v2647 = vld [vmem:[#allocation11 + $0x150] sm:$0xff]
    %v2648 = vld [vmem:[#allocation11 + $0x158] sm:$0xff]
    %v2649 = vld [vmem:[#allocation11 + $0x160] sm:$0xff]
    %v2650 = vld [vmem:[#allocation11 + $0x168] sm:$0xff]
    %v2651 = vld [vmem:[#allocation11 + $0x170] sm:$0xff]
    %v2652 = vld [vmem:[#allocation11 + $0x178] sm:$0xff]
    %v2653 = vld [vmem:[#allocation11 + $0x180] sm:$0xff]
    %v2654 = vld [vmem:[#allocation11 + $0x188] sm:$0xff]
    %v2655 = vld [vmem:[#allocation11 + $0x190] sm:$0xff]
    %v2656 = vld [vmem:[#allocation11 + $0x198] sm:$0xff]
    %v2657 = vld [vmem:[#allocation11 + $0x1a0] sm:$0xff]
    %v2658 = vld [vmem:[#allocation11 + $0x1a8] sm:$0xff]
    %v2659 = vld [vmem:[#allocation11 + $0x1b0] sm:$0xff]
    %v2660 = vld [vmem:[#allocation11 + $0x1b8] sm:$0xff]
    %v2661 = vld [vmem:[#allocation11 + $0x1c0] sm:$0xff]
    %v2662 = vld [vmem:[#allocation11 + $0x1c8] sm:$0xff]
    %v2663 = vld [vmem:[#allocation11 + $0x1d0] sm:$0xff]
    %v2664 = vld [vmem:[#allocation11 + $0x1d8] sm:$0xff]
    %v2665 = vld [vmem:[#allocation11 + $0x1e0] sm:$0xff]
    %v2666 = vld [vmem:[#allocation11 + $0x1e8] sm:$0xff]
    %v2667 = vld [vmem:[#allocation11 + $0x1f0] sm:$0xff]
    %v2668 = vld [vmem:[#allocation11 + $0x1f8] sm:$0xff]
    %v2669 = vld [vmem:[#allocation11 + $0x200] sm:$0xff]
    %v2670 = vld [vmem:[#allocation11 + $0x208] sm:$0xff]
    %v2671 = vld [vmem:[#allocation11 + $0x210] sm:$0xff]
    %v2672 = vld [vmem:[#allocation11 + $0x218] sm:$0xff]
    %v2673 = vld [vmem:[#allocation11 + $0x220] sm:$0xff]
    %v2674 = vld [vmem:[#allocation11 + $0x228] sm:$0xff]
    %v2675 = vld [vmem:[#allocation11 + $0x230] sm:$0xff]
    %v2676 = vld [vmem:[#allocation11 + $0x238] sm:$0xff]
    %v2677 = vld [vmem:[#allocation11 + $0x240] sm:$0xff]
    %v2678 = vld [vmem:[#allocation11 + $0x248] sm:$0xff]
    %v2679 = vld [vmem:[#allocation11 + $0x250] sm:$0xff]
    %v2680 = vld [vmem:[#allocation11 + $0x258] sm:$0xff]
    %v2681 = vld [vmem:[#allocation11 + $0x260] sm:$0xff]
    %v2682 = vld [vmem:[#allocation11 + $0x268] sm:$0xff]
    %v2683 = vld [vmem:[#allocation11 + $0x270] sm:$0xff]
    %v2684 = vld [vmem:[#allocation11 + $0x278] sm:$0xff]
    %v2685 = vld [vmem:[#allocation11 + $0x280] sm:$0xff]
    %v2686 = vld [vmem:[#allocation11 + $0x288] sm:$0xff]
    %v2687 = vld [vmem:[#allocation11 + $0x290] sm:$0xff]
    %v2688 = vld [vmem:[#allocation11 + $0x298] sm:$0xff]
    %v2689 = vld [vmem:[#allocation11 + $0x2a0] sm:$0xff]
    %v2690 = vld [vmem:[#allocation11 + $0x2a8] sm:$0xff]
    %v2691 = vld [vmem:[#allocation11 + $0x2b0] sm:$0xff]
    %v2692 = vld [vmem:[#allocation11 + $0x2b8] sm:$0xff]
    %v2693 = vld [vmem:[#allocation11 + $0x2c0] sm:$0xff]
    %v2694 = vld [vmem:[#allocation11 + $0x2c8] sm:$0xff]
    %v2695 = vld [vmem:[#allocation11 + $0x2d0] sm:$0xff]
    %v2696 = vld [vmem:[#allocation11 + $0x2d8] sm:$0xff]
    %v2697 = vld [vmem:[#allocation11 + $0x2e0] sm:$0xff]
    %v2698 = vld [vmem:[#allocation11 + $0x2e8] sm:$0xff]
    %v2699 = vld [vmem:[#allocation11 + $0x2f0] sm:$0xff]
    %v2700 = vld [vmem:[#allocation11 + $0x2f8] sm:$0xff]
    %v2701 = vld [vmem:[#allocation11 + $0x300] sm:$0xff]
    %v2702 = vld [vmem:[#allocation11 + $0x308] sm:$0xff]
    %v2703 = vld [vmem:[#allocation11 + $0x310] sm:$0xff]
    %v2704 = vld [vmem:[#allocation11 + $0x318] sm:$0xff]
    %v2705 = vld [vmem:[#allocation11 + $0x320] sm:$0xff]
    %v2706 = vld [vmem:[#allocation11 + $0x328] sm:$0xff]
    %v2707 = vld [vmem:[#allocation11 + $0x330] sm:$0xff]
    %v2708 = vld [vmem:[#allocation11 + $0x338] sm:$0xff]
    %v2709 = vld [vmem:[#allocation11 + $0x340] sm:$0xff]
    %v2710 = vld [vmem:[#allocation11 + $0x348] sm:$0xff]
    %v2711 = vld [vmem:[#allocation11 + $0x350] sm:$0xff]
    %v2712 = vld [vmem:[#allocation11 + $0x358] sm:$0xff]
    %v2713 = vld [vmem:[#allocation11 + $0x360] sm:$0xff]
    %v2714 = vld [vmem:[#allocation11 + $0x368] sm:$0xff]
    %v2715 = vld [vmem:[#allocation11 + $0x370] sm:$0xff]
    %v2716 = vld [vmem:[#allocation11 + $0x378] sm:$0xff]
    %v2717 = vld [vmem:[#allocation11 + $0x380] sm:$0xff]
    %v2718 = vld [vmem:[#allocation11 + $0x388] sm:$0xff]
    %v2719 = vld [vmem:[#allocation11 + $0x390] sm:$0xff]
    %v2720 = vld [vmem:[#allocation11 + $0x398] sm:$0xff]
    %v2721 = vld [vmem:[#allocation11 + $0x3a0] sm:$0xff]
    %v2722 = vld [vmem:[#allocation11 + $0x3a8] sm:$0xff]
    %v2723 = vld [vmem:[#allocation11 + $0x3b0] sm:$0xff]
    %v2724 = vld [vmem:[#allocation11 + $0x3b8] sm:$0xff]
    %v2725 = vld [vmem:[#allocation11 + $0x3c0] sm:$0xff]
    %v2726 = vld [vmem:[#allocation11 + $0x3c8] sm:$0xff]
    %v2727 = vld [vmem:[#allocation11 + $0x3d0] sm:$0xff]
    %v2728 = vld [vmem:[#allocation11 + $0x3d8] sm:$0xff]
    %v2729 = vld [vmem:[#allocation11 + $0x3e0] sm:$0xff]
    %v2730 = vld [vmem:[#allocation11 + $0x3e8] sm:$0xff]
    %v2731 = vld [vmem:[#allocation11 + $0x3f0] sm:$0xff]
    %v2732 = vld [vmem:[#allocation11 + $0x3f8] sm:$0xff]
    %v2733 = vld [vmem:[%s8] sm:$0x3]
    %v2735 = vlaneseq
    %v2736 = vshrl.u32 %v2735, 7
    %v2737 = vsub.s32 0, %v2736
    %v2738 = vrot.slane %v2733, %v2737
    %v2739 = vlaneseq
    %v2740 = vshrl.u32 %v2739, 7
    %v2741 = vsub.s32 1, %v2740
    %v2742 = vrot.slane %v2733, %v2741
    %v2873 = vunpack.c.l.b16 %v2605
    %v2874 = vunpack.c.h.b16 %v2605
    %v2875 = vunpack.c.l.b16 %v2606
    %v2876 = vunpack.c.h.b16 %v2606
    %v2877 = vunpack.c.l.b16 %v2607
    %v2878 = vunpack.c.h.b16 %v2607
    %v2879 = vunpack.c.l.b16 %v2608
    %v2880 = vunpack.c.h.b16 %v2608
    %v2881 = vunpack.c.l.b16 %v2609
    %v2882 = vunpack.c.h.b16 %v2609
    %v2883 = vunpack.c.l.b16 %v2610
    %v2884 = vunpack.c.h.b16 %v2610
    %v2885 = vunpack.c.l.b16 %v2611
    %v2886 = vunpack.c.h.b16 %v2611
    %v2887 = vunpack.c.l.b16 %v2612
    %v2888 = vunpack.c.h.b16 %v2612
    %v2889 = vunpack.c.l.b16 %v2613
    %v2890 = vunpack.c.h.b16 %v2613
    %v2891 = vunpack.c.l.b16 %v2614
    %v2892 = vunpack.c.h.b16 %v2614
    %v2893 = vunpack.c.l.b16 %v2615
    %v2894 = vunpack.c.h.b16 %v2615
    %v2895 = vunpack.c.l.b16 %v2616
    %v2896 = vunpack.c.h.b16 %v2616
    %v2897 = vunpack.c.l.b16 %v2617
    %v2898 = vunpack.c.h.b16 %v2617
    %v2899 = vunpack.c.l.b16 %v2618
    %v2900 = vunpack.c.h.b16 %v2618
    %v2901 = vunpack.c.l.b16 %v2619
    %v2902 = vunpack.c.h.b16 %v2619
    %v2903 = vunpack.c.l.b16 %v2620
    %v2904 = vunpack.c.h.b16 %v2620
    %v2905 = vunpack.c.l.b16 %v2621
    %v2906 = vunpack.c.h.b16 %v2621
    %v2907 = vunpack.c.l.b16 %v2622
    %v2908 = vunpack.c.h.b16 %v2622
    %v2909 = vunpack.c.l.b16 %v2623
    %v2910 = vunpack.c.h.b16 %v2623
    %v2911 = vunpack.c.l.b16 %v2624
    %v2912 = vunpack.c.h.b16 %v2624
    %v2913 = vunpack.c.l.b16 %v2625
    %v2914 = vunpack.c.h.b16 %v2625
    %v2915 = vunpack.c.l.b16 %v2626
    %v2916 = vunpack.c.h.b16 %v2626
    %v2917 = vunpack.c.l.b16 %v2627
    %v2918 = vunpack.c.h.b16 %v2627
    %v2919 = vunpack.c.l.b16 %v2628
    %v2920 = vunpack.c.h.b16 %v2628
    %v2921 = vunpack.c.l.b16 %v2629
    %v2922 = vunpack.c.h.b16 %v2629
    %v2923 = vunpack.c.l.b16 %v2630
    %v2924 = vunpack.c.h.b16 %v2630
    %v2925 = vunpack.c.l.b16 %v2631
    %v2926 = vunpack.c.h.b16 %v2631
    %v2927 = vunpack.c.l.b16 %v2632
    %v2928 = vunpack.c.h.b16 %v2632
    %v2929 = vunpack.c.l.b16 %v2633
    %v2930 = vunpack.c.h.b16 %v2633
    %v2931 = vunpack.c.l.b16 %v2634
    %v2932 = vunpack.c.h.b16 %v2634
    %v2933 = vunpack.c.l.b16 %v2635
    %v2934 = vunpack.c.h.b16 %v2635
    %v2935 = vunpack.c.l.b16 %v2636
    %v2936 = vunpack.c.h.b16 %v2636
    %v2937 = vunpack.c.l.b16 %v2637
    %v2938 = vunpack.c.h.b16 %v2637
    %v2939 = vunpack.c.l.b16 %v2638
    %v2940 = vunpack.c.h.b16 %v2638
    %v2941 = vunpack.c.l.b16 %v2639
    %v2942 = vunpack.c.h.b16 %v2639
    %v2943 = vunpack.c.l.b16 %v2640
    %v2944 = vunpack.c.h.b16 %v2640
    %v2945 = vunpack.c.l.b16 %v2641
    %v2946 = vunpack.c.h.b16 %v2641
    %v2947 = vunpack.c.l.b16 %v2642
    %v2948 = vunpack.c.h.b16 %v2642
    %v2949 = vunpack.c.l.b16 %v2643
    %v2950 = vunpack.c.h.b16 %v2643
    %v2951 = vunpack.c.l.b16 %v2644
    %v2952 = vunpack.c.h.b16 %v2644
    %v2953 = vunpack.c.l.b16 %v2645
    %v2954 = vunpack.c.h.b16 %v2645
    %v2955 = vunpack.c.l.b16 %v2646
    %v2956 = vunpack.c.h.b16 %v2646
    %v2957 = vunpack.c.l.b16 %v2647
    %v2958 = vunpack.c.h.b16 %v2647
    %v2959 = vunpack.c.l.b16 %v2648
    %v2960 = vunpack.c.h.b16 %v2648
    %v2961 = vunpack.c.l.b16 %v2649
    %v2962 = vunpack.c.h.b16 %v2649
    %v2963 = vunpack.c.l.b16 %v2650
    %v2964 = vunpack.c.h.b16 %v2650
    %v2965 = vunpack.c.l.b16 %v2651
    %v2966 = vunpack.c.h.b16 %v2651
    %v2967 = vunpack.c.l.b16 %v2652
    %v2968 = vunpack.c.h.b16 %v2652
    %v2969 = vunpack.c.l.b16 %v2653
    %v2970 = vunpack.c.h.b16 %v2653
    %v2971 = vunpack.c.l.b16 %v2654
    %v2972 = vunpack.c.h.b16 %v2654
    %v2973 = vunpack.c.l.b16 %v2655
    %v2974 = vunpack.c.h.b16 %v2655
    %v2975 = vunpack.c.l.b16 %v2656
    %v2976 = vunpack.c.h.b16 %v2656
    %v2977 = vunpack.c.l.b16 %v2657
    %v2978 = vunpack.c.h.b16 %v2657
    %v2979 = vunpack.c.l.b16 %v2658
    %v2980 = vunpack.c.h.b16 %v2658
    %v2981 = vunpack.c.l.b16 %v2659
    %v2982 = vunpack.c.h.b16 %v2659
    %v2983 = vunpack.c.l.b16 %v2660
    %v2984 = vunpack.c.h.b16 %v2660
    %v2985 = vunpack.c.l.b16 %v2661
    %v2986 = vunpack.c.h.b16 %v2661
    %v2987 = vunpack.c.l.b16 %v2662
    %v2988 = vunpack.c.h.b16 %v2662
    %v2989 = vunpack.c.l.b16 %v2663
    %v2990 = vunpack.c.h.b16 %v2663
    %v2991 = vunpack.c.l.b16 %v2664
    %v2992 = vunpack.c.h.b16 %v2664
    %v2993 = vunpack.c.l.b16 %v2665
    %v2994 = vunpack.c.h.b16 %v2665
    %v2995 = vunpack.c.l.b16 %v2666
    %v2996 = vunpack.c.h.b16 %v2666
    %v2997 = vunpack.c.l.b16 %v2667
    %v2998 = vunpack.c.h.b16 %v2667
    %v2999 = vunpack.c.l.b16 %v2668
    %v3000 = vunpack.c.h.b16 %v2668
    %v3001 = vunpack.c.l.b16 %v2669
    %v3002 = vunpack.c.h.b16 %v2669
    %v3003 = vunpack.c.l.b16 %v2670
    %v3004 = vunpack.c.h.b16 %v2670
    %v3005 = vunpack.c.l.b16 %v2671
    %v3006 = vunpack.c.h.b16 %v2671
    %v3007 = vunpack.c.l.b16 %v2672
    %v3008 = vunpack.c.h.b16 %v2672
    %v3009 = vunpack.c.l.b16 %v2673
    %v3010 = vunpack.c.h.b16 %v2673
    %v3011 = vunpack.c.l.b16 %v2674
    %v3012 = vunpack.c.h.b16 %v2674
    %v3013 = vunpack.c.l.b16 %v2675
    %v3014 = vunpack.c.h.b16 %v2675
    %v3015 = vunpack.c.l.b16 %v2676
    %v3016 = vunpack.c.h.b16 %v2676
    %v3017 = vunpack.c.l.b16 %v2677
    %v3018 = vunpack.c.h.b16 %v2677
    %v3019 = vunpack.c.l.b16 %v2678
    %v3020 = vunpack.c.h.b16 %v2678
    %v3021 = vunpack.c.l.b16 %v2679
    %v3022 = vunpack.c.h.b16 %v2679
    %v3023 = vunpack.c.l.b16 %v2680
    %v3024 = vunpack.c.h.b16 %v2680
    %v3025 = vunpack.c.l.b16 %v2681
    %v3026 = vunpack.c.h.b16 %v2681
    %v3027 = vunpack.c.l.b16 %v2682
    %v3028 = vunpack.c.h.b16 %v2682
    %v3029 = vunpack.c.l.b16 %v2683
    %v3030 = vunpack.c.h.b16 %v2683
    %v3031 = vunpack.c.l.b16 %v2684
    %v3032 = vunpack.c.h.b16 %v2684
    %v3033 = vunpack.c.l.b16 %v2685
    %v3034 = vunpack.c.h.b16 %v2685
    %v3035 = vunpack.c.l.b16 %v2686
    %v3036 = vunpack.c.h.b16 %v2686
    %v3037 = vunpack.c.l.b16 %v2687
    %v3038 = vunpack.c.h.b16 %v2687
    %v3039 = vunpack.c.l.b16 %v2688
    %v3040 = vunpack.c.h.b16 %v2688
    %v3041 = vunpack.c.l.b16 %v2689
    %v3042 = vunpack.c.h.b16 %v2689
    %v3043 = vunpack.c.l.b16 %v2690
    %v3044 = vunpack.c.h.b16 %v2690
    %v3045 = vunpack.c.l.b16 %v2691
    %v3046 = vunpack.c.h.b16 %v2691
    %v3047 = vunpack.c.l.b16 %v2692
    %v3048 = vunpack.c.h.b16 %v2692
    %v3049 = vunpack.c.l.b16 %v2693
    %v3050 = vunpack.c.h.b16 %v2693
    %v3051 = vunpack.c.l.b16 %v2694
    %v3052 = vunpack.c.h.b16 %v2694
    %v3053 = vunpack.c.l.b16 %v2695
    %v3054 = vunpack.c.h.b16 %v2695
    %v3055 = vunpack.c.l.b16 %v2696
    %v3056 = vunpack.c.h.b16 %v2696
    %v3057 = vunpack.c.l.b16 %v2697
    %v3058 = vunpack.c.h.b16 %v2697
    %v3059 = vunpack.c.l.b16 %v2698
    %v3060 = vunpack.c.h.b16 %v2698
    %v3061 = vunpack.c.l.b16 %v2699
    %v3062 = vunpack.c.h.b16 %v2699
    %v3063 = vunpack.c.l.b16 %v2700
    %v3064 = vunpack.c.h.b16 %v2700
    %v3065 = vunpack.c.l.b16 %v2701
    %v3066 = vunpack.c.h.b16 %v2701
    %v3067 = vunpack.c.l.b16 %v2702
    %v3068 = vunpack.c.h.b16 %v2702
    %v3069 = vunpack.c.l.b16 %v2703
    %v3070 = vunpack.c.h.b16 %v2703
    %v3071 = vunpack.c.l.b16 %v2704
    %v3072 = vunpack.c.h.b16 %v2704
    %v3073 = vunpack.c.l.b16 %v2705
    %v3074 = vunpack.c.h.b16 %v2705
    %v3075 = vunpack.c.l.b16 %v2706
    %v3076 = vunpack.c.h.b16 %v2706
    %v3077 = vunpack.c.l.b16 %v2707
    %v3078 = vunpack.c.h.b16 %v2707
    %v3079 = vunpack.c.l.b16 %v2708
    %v3080 = vunpack.c.h.b16 %v2708
    %v3081 = vunpack.c.l.b16 %v2709
    %v3082 = vunpack.c.h.b16 %v2709
    %v3083 = vunpack.c.l.b16 %v2710
    %v3084 = vunpack.c.h.b16 %v2710
    %v3085 = vunpack.c.l.b16 %v2711
    %v3086 = vunpack.c.h.b16 %v2711
    %v3087 = vunpack.c.l.b16 %v2712
    %v3088 = vunpack.c.h.b16 %v2712
    %v3089 = vunpack.c.l.b16 %v2713
    %v3090 = vunpack.c.h.b16 %v2713
    %v3091 = vunpack.c.l.b16 %v2714
    %v3092 = vunpack.c.h.b16 %v2714
    %v3093 = vunpack.c.l.b16 %v2715
    %v3094 = vunpack.c.h.b16 %v2715
    %v3095 = vunpack.c.l.b16 %v2716
    %v3096 = vunpack.c.h.b16 %v2716
    %v3097 = vunpack.c.l.b16 %v2717
    %v3098 = vunpack.c.h.b16 %v2717
    %v3099 = vunpack.c.l.b16 %v2718
    %v3100 = vunpack.c.h.b16 %v2718
    %v3101 = vunpack.c.l.b16 %v2719
    %v3102 = vunpack.c.h.b16 %v2719
    %v3103 = vunpack.c.l.b16 %v2720
    %v3104 = vunpack.c.h.b16 %v2720
    %v3105 = vunpack.c.l.b16 %v2721
    %v3106 = vunpack.c.h.b16 %v2721
    %v3107 = vunpack.c.l.b16 %v2722
    %v3108 = vunpack.c.h.b16 %v2722
    %v3109 = vunpack.c.l.b16 %v2723
    %v3110 = vunpack.c.h.b16 %v2723
    %v3111 = vunpack.c.l.b16 %v2724
    %v3112 = vunpack.c.h.b16 %v2724
    %v3113 = vunpack.c.l.b16 %v2725
    %v3114 = vunpack.c.h.b16 %v2725
    %v3115 = vunpack.c.l.b16 %v2726
    %v3116 = vunpack.c.h.b16 %v2726
    %v3117 = vunpack.c.l.b16 %v2727
    %v3118 = vunpack.c.h.b16 %v2727
    %v3119 = vunpack.c.l.b16 %v2728
    %v3120 = vunpack.c.h.b16 %v2728
    %v3121 = vunpack.c.l.b16 %v2729
    %v3122 = vunpack.c.h.b16 %v2729
    %v3123 = vunpack.c.l.b16 %v2730
    %v3124 = vunpack.c.h.b16 %v2730
    %v3125 = vunpack.c.l.b16 %v2731
    %v3126 = vunpack.c.h.b16 %v2731
    %v3127 = vunpack.c.l.b16 %v2732
    %v3128 = vunpack.c.h.b16 %v2732
    %v3129 = vpack.c.b16 %v2875, %v2873
    %v3130 = vpack.c.b16 %v2876, %v2874
    %v3131 = vpack.c.b16 %v2879, %v2877
    %v3132 = vpack.c.b16 %v2880, %v2878
    %v3133 = vpack.c.b16 %v2883, %v2881
    %v3134 = vpack.c.b16 %v2884, %v2882
    %v3135 = vpack.c.b16 %v2887, %v2885
    %v3136 = vpack.c.b16 %v2888, %v2886
    %v3137 = vpack.c.b16 %v2891, %v2889
    %v3138 = vpack.c.b16 %v2892, %v2890
    %v3139 = vpack.c.b16 %v2895, %v2893
    %v3140 = vpack.c.b16 %v2896, %v2894
    %v3141 = vpack.c.b16 %v2899, %v2897
    %v3142 = vpack.c.b16 %v2900, %v2898
    %v3143 = vpack.c.b16 %v2903, %v2901
    %v3144 = vpack.c.b16 %v2904, %v2902
    %v3145 = vpack.c.b16 %v2907, %v2905
    %v3146 = vpack.c.b16 %v2908, %v2906
    %v3147 = vpack.c.b16 %v2911, %v2909
    %v3148 = vpack.c.b16 %v2912, %v2910
    %v3149 = vpack.c.b16 %v2915, %v2913
    %v3150 = vpack.c.b16 %v2916, %v2914
    %v3151 = vpack.c.b16 %v2919, %v2917
    %v3152 = vpack.c.b16 %v2920, %v2918
    %v3153 = vpack.c.b16 %v2923, %v2921
    %v3154 = vpack.c.b16 %v2924, %v2922
    %v3155 = vpack.c.b16 %v2927, %v2925
    %v3156 = vpack.c.b16 %v2928, %v2926
    %v3157 = vpack.c.b16 %v2931, %v2929
    %v3158 = vpack.c.b16 %v2932, %v2930
    %v3159 = vpack.c.b16 %v2935, %v2933
    %v3160 = vpack.c.b16 %v2936, %v2934
    %v3161 = vpack.c.b16 %v2939, %v2937
    %v3162 = vpack.c.b16 %v2940, %v2938
    %v3163 = vpack.c.b16 %v2943, %v2941
    %v3164 = vpack.c.b16 %v2944, %v2942
    %v3165 = vpack.c.b16 %v2947, %v2945
    %v3166 = vpack.c.b16 %v2948, %v2946
    %v3167 = vpack.c.b16 %v2951, %v2949
    %v3168 = vpack.c.b16 %v2952, %v2950
    %v3169 = vpack.c.b16 %v2955, %v2953
    %v3170 = vpack.c.b16 %v2956, %v2954
    %v3171 = vpack.c.b16 %v2959, %v2957
    %v3172 = vpack.c.b16 %v2960, %v2958
    %v3173 = vpack.c.b16 %v2963, %v2961
    %v3174 = vpack.c.b16 %v2964, %v2962
    %v3175 = vpack.c.b16 %v2967, %v2965
    %v3176 = vpack.c.b16 %v2968, %v2966
    %v3177 = vpack.c.b16 %v2971, %v2969
    %v3178 = vpack.c.b16 %v2972, %v2970
    %v3179 = vpack.c.b16 %v2975, %v2973
    %v3180 = vpack.c.b16 %v2976, %v2974
    %v3181 = vpack.c.b16 %v2979, %v2977
    %v3182 = vpack.c.b16 %v2980, %v2978
    %v3183 = vpack.c.b16 %v2983, %v2981
    %v3184 = vpack.c.b16 %v2984, %v2982
    %v3185 = vpack.c.b16 %v2987, %v2985
    %v3186 = vpack.c.b16 %v2988, %v2986
    %v3187 = vpack.c.b16 %v2991, %v2989
    %v3188 = vpack.c.b16 %v2992, %v2990
    %v3189 = vpack.c.b16 %v2995, %v2993
    %v3190 = vpack.c.b16 %v2996, %v2994
    %v3191 = vpack.c.b16 %v2999, %v2997
    %v3192 = vpack.c.b16 %v3000, %v2998
    %v3193 = vpack.c.b16 %v3003, %v3001
    %v3194 = vpack.c.b16 %v3004, %v3002
    %v3195 = vpack.c.b16 %v3007, %v3005
    %v3196 = vpack.c.b16 %v3008, %v3006
    %v3197 = vpack.c.b16 %v3011, %v3009
    %v3198 = vpack.c.b16 %v3012, %v3010
    %v3199 = vpack.c.b16 %v3015, %v3013
    %v3200 = vpack.c.b16 %v3016, %v3014
    %v3201 = vpack.c.b16 %v3019, %v3017
    %v3202 = vpack.c.b16 %v3020, %v3018
    %v3203 = vpack.c.b16 %v3023, %v3021
    %v3204 = vpack.c.b16 %v3024, %v3022
    %v3205 = vpack.c.b16 %v3027, %v3025
    %v3206 = vpack.c.b16 %v3028, %v3026
    %v3207 = vpack.c.b16 %v3031, %v3029
    %v3208 = vpack.c.b16 %v3032, %v3030
    %v3209 = vpack.c.b16 %v3035, %v3033
    %v3210 = vpack.c.b16 %v3036, %v3034
    %v3211 = vpack.c.b16 %v3039, %v3037
    %v3212 = vpack.c.b16 %v3040, %v3038
    %v3213 = vpack.c.b16 %v3043, %v3041
    %v3214 = vpack.c.b16 %v3044, %v3042
    %v3215 = vpack.c.b16 %v3047, %v3045
    %v3216 = vpack.c.b16 %v3048, %v3046
    %v3217 = vpack.c.b16 %v3051, %v3049
    %v3218 = vpack.c.b16 %v3052, %v3050
    %v3219 = vpack.c.b16 %v3055, %v3053
    %v3220 = vpack.c.b16 %v3056, %v3054
    %v3221 = vpack.c.b16 %v3059, %v3057
    %v3222 = vpack.c.b16 %v3060, %v3058
    %v3223 = vpack.c.b16 %v3063, %v3061
    %v3224 = vpack.c.b16 %v3064, %v3062
    %v3225 = vpack.c.b16 %v3067, %v3065
    %v3226 = vpack.c.b16 %v3068, %v3066
    %v3227 = vpack.c.b16 %v3071, %v3069
    %v3228 = vpack.c.b16 %v3072, %v3070
    %v3229 = vpack.c.b16 %v3075, %v3073
    %v3230 = vpack.c.b16 %v3076, %v3074
    %v3231 = vpack.c.b16 %v3079, %v3077
    %v3232 = vpack.c.b16 %v3080, %v3078
    %v3233 = vpack.c.b16 %v3083, %v3081
    %v3234 = vpack.c.b16 %v3084, %v3082
    %v3235 = vpack.c.b16 %v3087, %v3085
    %v3236 = vpack.c.b16 %v3088, %v3086
    %v3237 = vpack.c.b16 %v3091, %v3089
    %v3238 = vpack.c.b16 %v3092, %v3090
    %v3239 = vpack.c.b16 %v3095, %v3093
    %v3240 = vpack.c.b16 %v3096, %v3094
    %v3241 = vpack.c.b16 %v3099, %v3097
    %v3242 = vpack.c.b16 %v3100, %v3098
    %v3243 = vpack.c.b16 %v3103, %v3101
    %v3244 = vpack.c.b16 %v3104, %v3102
    %v3245 = vpack.c.b16 %v3107, %v3105
    %v3246 = vpack.c.b16 %v3108, %v3106
    %v3247 = vpack.c.b16 %v3111, %v3109
    %v3248 = vpack.c.b16 %v3112, %v3110
    %v3249 = vpack.c.b16 %v3115, %v3113
    %v3250 = vpack.c.b16 %v3116, %v3114
    %v3251 = vpack.c.b16 %v3119, %v3117
    %v3252 = vpack.c.b16 %v3120, %v3118
    %v3253 = vpack.c.b16 %v3123, %v3121
    %v3254 = vpack.c.b16 %v3124, %v3122
    %v3255 = vpack.c.b16 %v3127, %v3125
    %v3256 = vpack.c.b16 %v3128, %v3126
    %3385 = vmatprep.subr.bf16.mxu0 %v3144
    %3386 = vmatpush1.bf16.msra.mxu0 %v3143
    %3387 = vmatprep.subr.bf16.mxu0 %v3142
    %3388 = vmatpush1.bf16.msra.mxu0 %v3141
    %3389 = vmatprep.subr.bf16.mxu0 %v3140
    %3390 = vmatpush1.bf16.msra.mxu0 %v3139
    %3391 = vmatprep.subr.bf16.mxu0 %v3138
    %3392 = vmatpush1.bf16.msra.mxu0 %v3137
    %3393 = vmatprep.subr.bf16.mxu0 %v3136
    %3394 = vmatpush1.bf16.msra.mxu0 %v3135
    %3395 = vmatprep.subr.bf16.mxu0 %v3134
    %3396 = vmatpush1.bf16.msra.mxu0 %v3133
    %3397 = vmatprep.subr.bf16.mxu0 %v3132
    %3398 = vmatpush1.bf16.msra.mxu0 %v3131
    %3399 = vmatprep.subr.bf16.mxu0 %v3130
    %3400 = vmatpush1.bf16.msra.mxu0 %v3129
    %3401 = vmatprep.subr.bf16.mxu0 %v3160
    %3402 = vmatpush2.bf16.msra.mxu0 %v3159
    %3403 = vmatprep.subr.bf16.mxu0 %v3158
    %3404 = vmatpush2.bf16.msra.mxu0 %v3157
    %3405 = vmatprep.subr.bf16.mxu0 %v3156
    %3406 = vmatpush2.bf16.msra.mxu0 %v3155
    %3407 = vmatprep.subr.bf16.mxu0 %v3154
    %3408 = vmatpush2.bf16.msra.mxu0 %v3153
    %3409 = vmatprep.subr.bf16.mxu0 %v3152
    %3410 = vmatpush2.bf16.msra.mxu0 %v3151
    %3411 = vmatprep.subr.bf16.mxu0 %v3150
    %3412 = vmatpush2.bf16.msra.mxu0 %v3149
    %3413 = vmatprep.subr.bf16.mxu0 %v3148
    %3414 = vmatpush2.bf16.msra.mxu0 %v3147
    %3415 = vmatprep.subr.bf16.mxu0 %v3146
    %3416 = vmatpush2.bf16.msra.mxu0 %v3145
    %3417 = vmatprep.mubr.bf16.mxu0 %v2598
    %3418 = vmatmul.mubr.bf16.gmra.mxu0 %v2597
    %v3419 = vpop.f32.mrf.mxu0
    %v3420 = vadd.f32 %v2738, %v3419
    %v3421 = vpop.f32.mrf.mxu0
    %v3422 = vadd.f32 %v2742, %v3421
    %v3423 = vpop.f32.mrf.mxu0
    %v3424 = vpop.f32.mrf.mxu0
    %3425 = vdwg.mxu0
    %3426 = vmatprep.subr.bf16.mxu0 %v3176
    %3427 = vmatpush1.bf16.msra.mxu0 %v3175
    %3428 = vmatprep.subr.bf16.mxu0 %v3174
    %3429 = vmatpush1.bf16.msra.mxu0 %v3173
    %3430 = vmatprep.subr.bf16.mxu0 %v3172
    %3431 = vmatpush1.bf16.msra.mxu0 %v3171
    %3432 = vmatprep.subr.bf16.mxu0 %v3170
    %3433 = vmatpush1.bf16.msra.mxu0 %v3169
    %3434 = vmatprep.subr.bf16.mxu0 %v3168
    %3435 = vmatpush1.bf16.msra.mxu0 %v3167
    %3436 = vmatprep.subr.bf16.mxu0 %v3166
    %3437 = vmatpush1.bf16.msra.mxu0 %v3165
    %3438 = vmatprep.subr.bf16.mxu0 %v3164
    %3439 = vmatpush1.bf16.msra.mxu0 %v3163
    %3440 = vmatprep.subr.bf16.mxu0 %v3162
    %3441 = vmatpush1.bf16.msra.mxu0 %v3161
    %3442 = vmatprep.subr.bf16.mxu0 %v3192
    %3443 = vmatpush2.bf16.msra.mxu0 %v3191
    %3444 = vmatprep.subr.bf16.mxu0 %v3190
    %3445 = vmatpush2.bf16.msra.mxu0 %v3189
    %3446 = vmatprep.subr.bf16.mxu0 %v3188
    %3447 = vmatpush2.bf16.msra.mxu0 %v3187
    %3448 = vmatprep.subr.bf16.mxu0 %v3186
    %3449 = vmatpush2.bf16.msra.mxu0 %v3185
    %3450 = vmatprep.subr.bf16.mxu0 %v3184
    %3451 = vmatpush2.bf16.msra.mxu0 %v3183
    %3452 = vmatprep.subr.bf16.mxu0 %v3182
    %3453 = vmatpush2.bf16.msra.mxu0 %v3181
    %3454 = vmatprep.subr.bf16.mxu0 %v3180
    %3455 = vmatpush2.bf16.msra.mxu0 %v3179
    %3456 = vmatprep.subr.bf16.mxu0 %v3178
    %3457 = vmatpush2.bf16.msra.mxu0 %v3177
    %3458 = vmatprep.mubr.bf16.mxu0 %v2600
    %3459 = vmatmul.mubr.bf16.gmra.mxu0 %v2599
    %v3460 = vpop.f32.mrf.mxu0
    %v3461 = vadd.f32 %v3420, %v3460
    %v3462 = vpop.f32.mrf.mxu0
    %v3463 = vadd.f32 %v3422, %v3462
    %v3464 = vpop.f32.mrf.mxu0
    %v3465 = vpop.f32.mrf.mxu0
    %3466 = vdwg.mxu0
    %3467 = vmatprep.subr.bf16.mxu0 %v3208
    %3468 = vmatpush1.bf16.msra.mxu0 %v3207
    %3469 = vmatprep.subr.bf16.mxu0 %v3206
    %3470 = vmatpush1.bf16.msra.mxu0 %v3205
    %3471 = vmatprep.subr.bf16.mxu0 %v3204
    %3472 = vmatpush1.bf16.msra.mxu0 %v3203
    %3473 = vmatprep.subr.bf16.mxu0 %v3202
    %3474 = vmatpush1.bf16.msra.mxu0 %v3201
    %3475 = vmatprep.subr.bf16.mxu0 %v3200
    %3476 = vmatpush1.bf16.msra.mxu0 %v3199
    %3477 = vmatprep.subr.bf16.mxu0 %v3198
    %3478 = vmatpush1.bf16.msra.mxu0 %v3197
    %3479 = vmatprep.subr.bf16.mxu0 %v3196
    %3480 = vmatpush1.bf16.msra.mxu0 %v3195
    %3481 = vmatprep.subr.bf16.mxu0 %v3194
    %3482 = vmatpush1.bf16.msra.mxu0 %v3193
    %3483 = vmatprep.subr.bf16.mxu0 %v3224
    %3484 = vmatpush2.bf16.msra.mxu0 %v3223
    %3485 = vmatprep.subr.bf16.mxu0 %v3222
    %3486 = vmatpush2.bf16.msra.mxu0 %v3221
    %3487 = vmatprep.subr.bf16.mxu0 %v3220
    %3488 = vmatpush2.bf16.msra.mxu0 %v3219
    %3489 = vmatprep.subr.bf16.mxu0 %v3218
    %3490 = vmatpush2.bf16.msra.mxu0 %v3217
    %3491 = vmatprep.subr.bf16.mxu0 %v3216
    %3492 = vmatpush2.bf16.msra.mxu0 %v3215
    %3493 = vmatprep.subr.bf16.mxu0 %v3214
    %3494 = vmatpush2.bf16.msra.mxu0 %v3213
    %3495 = vmatprep.subr.bf16.mxu0 %v3212
    %3496 = vmatpush2.bf16.msra.mxu0 %v3211
    %3497 = vmatprep.subr.bf16.mxu0 %v3210
    %3498 = vmatpush2.bf16.msra.mxu0 %v3209
    %3499 = vmatprep.mubr.bf16.mxu0 %v2602
    %3500 = vmatmul.mubr.bf16.gmra.mxu0 %v2601
    %v3501 = vpop.f32.mrf.mxu0
    %v3502 = vadd.f32 %v3461, %v3501
    %v3503 = vpop.f32.mrf.mxu0
    %v3504 = vadd.f32 %v3463, %v3503
    %v3505 = vpop.f32.mrf.mxu0
    %v3506 = vpop.f32.mrf.mxu0
    %3507 = vdwg.mxu0
    %3508 = vmatprep.subr.bf16.mxu0 %v3240
    %3509 = vmatpush1.bf16.msra.mxu0 %v3239
    %3510 = vmatprep.subr.bf16.mxu0 %v3238
    %3511 = vmatpush1.bf16.msra.mxu0 %v3237
    %3512 = vmatprep.subr.bf16.mxu0 %v3236
    %3513 = vmatpush1.bf16.msra.mxu0 %v3235
    %3514 = vmatprep.subr.bf16.mxu0 %v3234
    %3515 = vmatpush1.bf16.msra.mxu0 %v3233
    %3516 = vmatprep.subr.bf16.mxu0 %v3232
    %3517 = vmatpush1.bf16.msra.mxu0 %v3231
    %3518 = vmatprep.subr.bf16.mxu0 %v3230
    %3519 = vmatpush1.bf16.msra.mxu0 %v3229
    %3520 = vmatprep.subr.bf16.mxu0 %v3228
    %3521 = vmatpush1.bf16.msra.mxu0 %v3227
    %3522 = vmatprep.subr.bf16.mxu0 %v3226
    %3523 = vmatpush1.bf16.msra.mxu0 %v3225
    %3524 = vmatprep.subr.bf16.mxu0 %v3256
    %3525 = vmatpush2.bf16.msra.mxu0 %v3255
    %3526 = vmatprep.subr.bf16.mxu0 %v3254
    %3527 = vmatpush2.bf16.msra.mxu0 %v3253
    %3528 = vmatprep.subr.bf16.mxu0 %v3252
    %3529 = vmatpush2.bf16.msra.mxu0 %v3251
    %3530 = vmatprep.subr.bf16.mxu0 %v3250
    %3531 = vmatpush2.bf16.msra.mxu0 %v3249
    %3532 = vmatprep.subr.bf16.mxu0 %v3248
    %3533 = vmatpush2.bf16.msra.mxu0 %v3247
    %3534 = vmatprep.subr.bf16.mxu0 %v3246
    %3535 = vmatpush2.bf16.msra.mxu0 %v3245
    %3536 = vmatprep.subr.bf16.mxu0 %v3244
    %3537 = vmatpush2.bf16.msra.mxu0 %v3243
    %3538 = vmatprep.subr.bf16.mxu0 %v3242
    %3539 = vmatpush2.bf16.msra.mxu0 %v3241
    %3540 = vmatprep.mubr.bf16.mxu0 %v2604
    %3541 = vmatmul.mubr.bf16.gmra.mxu0 %v2603
    %v3542 = vpop.f32.mrf.mxu0
    %v3543 = vadd.f32 %v3502, %v3542
    %v3544 = vpop.f32.mrf.mxu0
    %v3545 = vadd.f32 %v3504, %v3544
    %v3546 = vpop.f32.mrf.mxu0
    %v3547 = vpop.f32.mrf.mxu0
    %3548 = vdwg.mxu0
    %v3549 = vxor.u32 %v3543, 2147483648
    %v3550 = vxor.u32 %v3545, 2147483648
    %v3551 = vmul.f32 %v3549, 1.442695
    %v3552 = vpow.pop %v3551
    %v3553 = vmul.f32 %v3550, 1.442695
    %v3554 = vpow.pop %v3553
    %v3555 = vadd.f32 %v3552, 1.0
    %v3556 = vadd.f32 %v3554, 1.0
    %v3557 = vrcp.pop %v3555
    %v3558 = vmul.f32 1.0, %v3557
    %v3559 = vrcp.pop %v3556
    %v3560 = vmul.f32 1.0, %v3559
    %3561 = vst [vmem:[#allocation13] sm:$0xff] %v3558
    %3562 = vst [vmem:[#allocation13 + $0x8] sm:$0xff] %v3560
    // Predicated region
    $region62: #{tpu_custom_call.1} parent=1 // pred_check
      _
    $region63: #{tpu_custom_call.1} parent=1 // pred_check_branch
      %3564 = sbr.rel (0) target = $region65
    $region64: #{tpu_custom_call.1} parent=1 // pred_region
      %s3566 = ssub.s32 256, 256
      %3567 = vsyncadd [#allocation4], %s3566
      %s3569 = sshll.u32 [#allocation13], 4
      %s3570 = int_to_ptr.vmem [resolvable:$true] %s3569
      %3572 = dma.vmem_to_hbm [thread:$0]  %s3570, 256, %s9, [#allocation4]
    $region65: #{tpu_custom_call.1} parent=1 // pred_fallthru
      _
    // Predicated region
    $region66: #{tpu_custom_call.1} parent=1 // pred_check
      _
    $region67: #{tpu_custom_call.1} parent=1 // pred_check_branch
      %3574 = sbr.rel (0) target = $region69
    $region68: #{tpu_custom_call.1} parent=1 // pred_region
      %3575 = dma.done [#allocation4], 256
    $region69: #{tpu_custom_call.1} parent=1 // pred_fallthru
      _
    %3576 = vsyncpa [#allocation3], 1
    %3577 = vsyncpa [#allocation6], 1
    %3578 = vsyncpa [#allocation9], 1
    %3579 = vsyncpa [#allocation12], 1
    %3580 = vsyncpa [#allocation4], 1

</llo_original>
